<compile_context>
chip_gen: v7x
topology: tpu7x:2x2x1
jax: 0.10.0
libtpu: 0.0.40
codegen_flags: <defaults>
</compile_context>

<pallas_src>
import jax
import jax.numpy as jnp
from jax.experimental import pallas as pl
from jax.experimental.pallas import tpu as pltpu


def _round_up(x, m):
    return (x + m - 1) // m * m


def _mm(a, w):
    """bf16 x bf16 MXU matmul with f32 accumulation."""
    return jnp.dot(a.astype(jnp.bfloat16), w, preferred_element_type=jnp.float32)


def _split3(g, h):
    return g[:, :h], g[:, h:2 * h], g[:, 2 * h:3 * h]


def _gru_combine(i_r, i_z, i_n, h_r, h_z, h_n, h):
    """PyTorch nn.GRU gate math (gate order r, z, n)."""
    r = jax.nn.sigmoid(i_r + h_r)
    z = jax.nn.sigmoid(i_z + h_z)
    n = jnp.tanh(i_n + r * h_n)
    return (1.0 - z) * n + z * h


def _make_stage1_kernel(hidden, fused):
    """GRU #1 + dot-product attention + GRU #2 — executed once per decode step."""

    def kernel(emb_ref, h0_ref, enc_ref,
               wi1_ref, wh1_ref, bi1_ref, bh1_ref,
               wie2_ref, wia2_ref, wh2_ref, bi2_ref, bh2_ref,
               hout_ref, aw_ref):
        emb = emb_ref[...]          # (Bp, E)    f32
        h0 = h0_ref[...]            # (Bp, H)    f32
        enc = enc_ref[...]          # (Bp, S, H) bf16

        # ---- GRU step 1 (seq len 1 => output == new hidden) ---------------
        if fused:
            gi = _mm(emb, wi1_ref[...]) + bi1_ref[...]
            gh = _mm(h0, wh1_ref[...]) + bh1_ref[...]
            h1 = _gru_combine(*_split3(gi, hidden), *_split3(gh, hidden), h0)
        else:
            i_r = _mm(emb, wi1_ref[0]) + bi1_ref[0]
            i_z = _mm(emb, wi1_ref[1]) + bi1_ref[1]
            i_n = _mm(emb, wi1_ref[2]) + bi1_ref[2]
            h_r = _mm(h0, wh1_ref[0]) + bh1_ref[0]
            h_z = _mm(h0, wh1_ref[1]) + bh1_ref[1]
            h_n = _mm(h0, wh1_ref[2]) + bh1_ref[2]
            h1 = _gru_combine(i_r, i_z, i_n, h_r, h_z, h_n, h0)

        # ---- dot-product attention: VPU multiply + XLU reductions ---------
        # (an MXU dot_general here runs at M=1 row utilization -> use VPU/XLU)
        scores = jnp.sum(h1[:, None, :] * enc, axis=-1)             # (Bp, S) f32
        scores = scores - jnp.max(scores, axis=-1, keepdims=True)
        e = jnp.exp(scores)
        attn = e / jnp.sum(e, axis=-1, keepdims=True)               # exact softmax
        aw = jnp.sum(attn[:, :, None] * enc, axis=1)                # (Bp, H) f32

        # ---- GRU step 2 on [embedding ; attention_weighted], concat-free --
        if fused:
            gi = _mm(emb, wie2_ref[...]) + _mm(aw, wia2_ref[...]) + bi2_ref[...]
            gh = _mm(h1, wh2_ref[...]) + bh2_ref[...]
            h2 = _gru_combine(*_split3(gi, hidden), *_split3(gh, hidden), h1)
        else:
            i_r = _mm(emb, wie2_ref[0]) + _mm(aw, wia2_ref[0]) + bi2_ref[0]
            i_z = _mm(emb, wie2_ref[1]) + _mm(aw, wia2_ref[1]) + bi2_ref[1]
            i_n = _mm(emb, wie2_ref[2]) + _mm(aw, wia2_ref[2]) + bi2_ref[2]
            h_r = _mm(h1, wh2_ref[0]) + bh2_ref[0]
            h_z = _mm(h1, wh2_ref[1]) + bh2_ref[1]
            h_n = _mm(h1, wh2_ref[2]) + bh2_ref[2]
            h2 = _gru_combine(i_r, i_z, i_n, h_r, h_z, h_n, h1)

        hout_ref[...] = h2
        aw_ref[...] = aw

    return kernel


def _fc_kernel(feats_ref, w_ref, b_ref, pred_ref):
    """One lane-dense vocab tile of fc_out: (Bp, F) bf16 @ (F, tile_v) bf16."""
    pred_ref[...] = (jnp.dot(feats_ref[...], w_ref[...],
                             preferred_element_type=jnp.float32)
                     + b_ref[...])


def make_decoder_params(key, vocab, embed, hidden):
    """Deterministic synthetic parameters (shapes match the nn.Module)."""
    ks = jax.random.split(key, 12)
    s = 1.0 / jnp.sqrt(hidden)

    def u(k, shape):
        return jax.random.uniform(k, shape, jnp.float32, -s, s)

    return dict(
        emb_table=jax.random.normal(ks[0], (vocab, embed), jnp.float32),
        # GRU #1: input size = embed
        w_ih1=u(ks[1], (3 * hidden, embed)),
        w_hh1=u(ks[2], (3 * hidden, hidden)),
        b_ih1=u(ks[3], (3 * hidden,)),
        b_hh1=u(ks[4], (3 * hidden,)),
        # GRU #2: input size = embed + hidden   (see TODO(synk) above)
        w_ih2=u(ks[5], (3 * hidden, embed + hidden)),
        w_hh2=u(ks[6], (3 * hidden, hidden)),
        b_ih2=u(ks[7], (3 * hidden,)),
        b_hh2=u(ks[8], (3 * hidden,)),
        # fc_out: (embed + 2*hidden) -> vocab, input order [h2, aw, emb]
        w_fc=u(ks[9], (vocab, embed + 2 * hidden)),
        b_fc=u(ks[10], (vocab,)),
    )


def _prep_gru(w_ih, w_hh, b_ih, b_hh, hidden, fused):
    """PyTorch (3H, In)/(3H, H) layout -> x @ W layout (fused or per-gate)."""
    if fused:
        # Single (In, 3H) slab per matmul; gate blocks [r | z | n] along lanes.
        return (w_ih.T, w_hh.T,
                b_ih.reshape(1, 3 * hidden), b_hh.reshape(1, 3 * hidden))
    in_dim = w_ih.shape[1]
    wi = jnp.transpose(w_ih.reshape(3, hidden, in_dim), (0, 2, 1))   # (3, In, H)
    wh = jnp.transpose(w_hh.reshape(3, hidden, hidden), (0, 2, 1))   # (3, H, H)
    return wi, wh, b_ih.reshape(3, 1, hidden), b_hh.reshape(3, 1, hidden)


def _vmem_budget_bytes():
    """Generation-aware VMEM budget with headroom (v7x has 64 MiB physical/TC)."""
    try:
        cap = int(pltpu.get_tpu_info().vmem_capacity_bytes)
    except Exception:
        cap = 64 * 1024 * 1024          # conservative (v7x-sized) fallback
    return min(cap * 3 // 4, 64 * 1024 * 1024)


def _pick_tile_v(v128, feat, b_pad, budget, max_tile_v=4096):
    """Largest lane-dense vocab tile whose double-buffered footprint fits VMEM."""
    cands = [v128] + [t for t in (4096, 2048, 1024, 512, 256, 128) if t < v128]
    cands = [t for t in cands if t <= max(max_tile_v, 128)]
    for t in cands:
        per_tile = feat * t * 2 + t * 4 + b_pad * t * 4    # bf16 W + f32 bias + f32 out
        if 2 * per_tile + b_pad * feat * 2 + (2 << 20) <= budget:
            return t
    return 128


def decoder_forward(params, decoder_input, hidden, enc_outputs, *, max_tile_v=4096):
    """decoder_input: (B,) int32; hidden: (B, H); enc_outputs: (S, B, H)."""
    B = decoder_input.shape[0]
    H = hidden.shape[-1]
    S = enc_outputs.shape[0]
    V, E = params["emb_table"].shape
    F = 2 * H + E                                   # fc_out input width [h2|aw|emb]
    B_pad = max(8, _round_up(B, 8))                 # fill sublanes / MXU M dim
    fused = (H % 128 == 0)                          # fused (In,3H) GRU matmuls if aligned

    vmem_budget = _vmem_budget_bytes()

    # --- glue: embedding gather, batch padding, weight packing -------------
    emb = params["emb_table"][decoder_input].astype(jnp.float32)           # (B, E)
    emb = jnp.pad(emb, ((0, B_pad - B), (0, 0)))
    h0 = jnp.pad(hidden.astype(jnp.float32), ((0, B_pad - B), (0, 0)))
    # One-time layout change to batch-major + bf16 (halves enc HBM/VMEM bytes).
    enc = jnp.transpose(enc_outputs, (1, 0, 2)).astype(jnp.bfloat16)       # (B, S, H)
    enc = jnp.pad(enc, ((0, B_pad - B), (0, 0), (0, 0)))

    wi1, wh1, bi1, bh1 = _prep_gru(params["w_ih1"], params["w_hh1"],
                                   params["b_ih1"], params["b_hh1"], H, fused)
    wi2, wh2, bi2, bh2 = _prep_gru(params["w_ih2"], params["w_hh2"],
                                   params["b_ih2"], params["b_hh2"], H, fused)
    if fused:
        wie2, wia2 = wi2[:E, :], wi2[E:, :]          # [emb ; aw] row split
    else:
        wie2, wia2 = wi2[:, :E, :], wi2[:, E:, :]    # [emb ; aw] column split

    bf16 = lambda x: x.astype(jnp.bfloat16)

    # --- stage 1: GRU #1 + attention + GRU #2, executed exactly once -------
    h2, aw = pl.pallas_call(
        _make_stage1_kernel(H, fused),
        out_shape=(jax.ShapeDtypeStruct((B_pad, H), jnp.float32),
                   jax.ShapeDtypeStruct((B_pad, H), jnp.float32)),
        compiler_params=pltpu.CompilerParams(vmem_limit_bytes=vmem_budget),
    )(emb, h0, enc,
      bf16(wi1), bf16(wh1), bi1, bh1,
      bf16(wie2), bf16(wia2), bf16(wh2), bi2, bh2)

    # Pre-concatenate + pre-cast the fc_out features once (tiny (Bp, F) slab),
    # so the vocab loop is a pure weight-streaming matmul with no casts.
    feats = jnp.concatenate([h2, aw, emb], axis=-1).astype(jnp.bfloat16)   # (Bp, F)

    # --- stage 2: fc_out tiled over a lane-dense (padded) vocab axis -------
    V128 = _round_up(V, 128)
    tile_v = _pick_tile_v(V128, F, B_pad, vmem_budget, max_tile_v)
    V_pad = _round_up(V128, tile_v)
    n_vt = V_pad // tile_v

    # fc weight rows ordered [decoder_output(H) ; attention_weighted(H) ; emb(E)]
    # TODO(synk): fc_out is weight-bandwidth bound at small batch; int8/int4
    # weight slabs (v5e/v6e) or fp8 (v7x) with per-column scales would
    # halve/quarter the streamed bytes.
    wfc = bf16(jnp.pad(params["w_fc"].T, ((0, 0), (0, V_pad - V))))        # (F, V_pad)
    bfc = jnp.pad(params["b_fc"], (0, V_pad - V)).reshape(1, V_pad)

    cost = pl.CostEstimate(
        flops=int(2 * B_pad * F * V_pad),
        transcendentals=0,
        bytes_accessed=int(F * V_pad * 2 + V_pad * 4
                           + B_pad * (F * 2 + V_pad * 4)))

    pred = pl.pallas_call(
        _fc_kernel,
        grid=(n_vt,),
        in_specs=[pl.BlockSpec((B_pad, F), lambda v: (0, 0)),
                  pl.BlockSpec((F, tile_v), lambda v: (0, v)),
                  pl.BlockSpec((1, tile_v), lambda v: (0, v))],
        out_specs=pl.BlockSpec((B_pad, tile_v), lambda v: (0, v)),
        out_shape=jax.ShapeDtypeStruct((B_pad, V_pad), jnp.float32),
        compiler_params=pltpu.CompilerParams(
            dimension_semantics=("parallel",),       # independent vocab tiles
            vmem_limit_bytes=vmem_budget),
        cost_estimate=cost,
    )(feats, wfc, bfc)

    # Strip batch / vocab padding (pad logit columns must never reach a
    # downstream softmax/argmax).
    return pred[:B, :V], h2[:B]


def _decoder_ref(params, decoder_input, hidden, enc_outputs):
    """Pure-JAX f32 reference with the same documented semantics."""
    emb = params["emb_table"][decoder_input].astype(jnp.float32)
    enc = jnp.transpose(enc_outputs, (1, 0, 2)).astype(jnp.float32)    # (B, S, H)

    def gru(x, h, w_ih, w_hh, b_ih, b_hh):
        gi = x @ w_ih.T + b_ih
        gh = h @ w_hh.T + b_hh
        i_r, i_z, i_n = jnp.split(gi, 3, axis=-1)
        h_r, h_z, h_n = jnp.split(gh, 3, axis=-1)
        r = jax.nn.sigmoid(i_r + h_r)
        z = jax.nn.sigmoid(i_z + h_z)
        n = jnp.tanh(i_n + r * h_n)
        return (1.0 - z) * n + z * h

    h1 = gru(emb, hidden.astype(jnp.float32),
             params["w_ih1"], params["w_hh1"], params["b_ih1"], params["b_hh1"])
    scores = jnp.einsum('bh,bsh->bs', h1, enc)
    attn = jax.nn.softmax(scores, axis=-1)
    aw = jnp.einsum('bs,bsh->bh', attn, enc)
    h2 = gru(jnp.concatenate([emb, aw], axis=-1), h1,
             params["w_ih2"], params["w_hh2"], params["b_ih2"], params["b_hh2"])
    feats = jnp.concatenate([h2, aw, emb], axis=-1)
    pred = feats @ params["w_fc"].T + params["b_fc"]
    return pred, h2


if __name__ == "__main__":
    # Small shapes consistent with the module's forward.
    V = 64    # word_index_len
    E = 16    # dec_embed_size
    H = 32    # enc_hidden_size == dec_hidden_size (required by fc_out width)
    S = 8     # encoder sequence length
    B = 2     # batch

    key = jax.random.PRNGKey(0)
    k_par, k_tok, k_hid, k_enc = jax.random.split(key, 4)

    params = make_decoder_params(k_par, V, E, H)
    decoder_input = jax.random.randint(k_tok, (B,), 0, V, dtype=jnp.int32)
    hidden = jax.random.normal(k_hid, (B, H), jnp.float32)
    enc_outputs = jax.random.normal(k_enc, (S, B, H), jnp.float32)

    pred, h_out = decoder_forward(params, decoder_input, hidden, enc_outputs)
    jax.block_until_ready((pred, h_out))

    assert pred.shape == (B, V) and h_out.shape == (B, H)
    assert bool(jnp.all(jnp.isfinite(pred))) and bool(jnp.all(jnp.isfinite(h_out)))

    # Loose-tolerance check vs. a pure-JAX f32 reference (kernel uses bf16 MXU
    # matmuls and bf16-resident encoder outputs).
    pred_ref, h_ref = _decoder_ref(params, decoder_input, hidden, enc_outputs)
    assert float(jnp.max(jnp.abs(pred - pred_ref))) < 1e-1, "pred mismatch"
    assert float(jnp.max(jnp.abs(h_out - h_ref))) < 1e-1, "hidden mismatch"

    print("KERNEL_OK")
</pallas_src>

<mosaic_0001>
module attributes {stable_mosaic.version = 11 : i64} {
  func.func @kernel(%arg0: memref<8x16xf32, #tpu.memory_space<vmem>>, %arg1: memref<8x32xf32, #tpu.memory_space<vmem>>, %arg2: memref<8x8x32xbf16, #tpu.memory_space<vmem>>, %arg3: memref<3x16x32xbf16, #tpu.memory_space<vmem>>, %arg4: memref<3x32x32xbf16, #tpu.memory_space<vmem>>, %arg5: memref<3x1x32xf32, #tpu.memory_space<vmem>>, %arg6: memref<3x1x32xf32, #tpu.memory_space<vmem>>, %arg7: memref<3x16x32xbf16, #tpu.memory_space<vmem>>, %arg8: memref<3x32x32xbf16, #tpu.memory_space<vmem>>, %arg9: memref<3x32x32xbf16, #tpu.memory_space<vmem>>, %arg10: memref<3x1x32xf32, #tpu.memory_space<vmem>>, %arg11: memref<3x1x32xf32, #tpu.memory_space<vmem>>, %arg12: memref<8x32xf32, #tpu.memory_space<vmem>>, %arg13: memref<8x32xf32, #tpu.memory_space<vmem>>) attributes {dimension_semantics = [], scalar_prefetch = 0 : i64, scratch_operands = 0 : i64, tpu.core_type = #tpu.core_type<tc>} {
    %c0 = arith.constant 0 : index
    %c0_0 = arith.constant 0 : index
    %0 = vector.load %arg0[%c0, %c0_0] : memref<8x16xf32, #tpu.memory_space<vmem>>, vector<8x16xf32>
    %c0_1 = arith.constant 0 : index
    %c0_2 = arith.constant 0 : index
    %1 = vector.load %arg1[%c0_1, %c0_2] : memref<8x32xf32, #tpu.memory_space<vmem>>, vector<8x32xf32>
    %c0_3 = arith.constant 0 : index
    %c0_4 = arith.constant 0 : index
    %c0_5 = arith.constant 0 : index
    %2 = vector.load %arg2[%c0_3, %c0_4, %c0_5] : memref<8x8x32xbf16, #tpu.memory_space<vmem>>, vector<8x8x32xbf16>
    %c0_6 = arith.constant 0 : index
    %c0_7 = arith.constant 0 : index
    %c0_8 = arith.constant 0 : index
    %3 = vector.load %arg3[%c0_6, %c0_7, %c0_8] : memref<3x16x32xbf16, #tpu.memory_space<vmem>>, vector<1x16x32xbf16>
    %4 = vector.shape_cast %3 : vector<1x16x32xbf16> to vector<16x32xbf16>
    %5 = arith.truncf %0 : vector<8x16xf32> to vector<8x16xbf16>
    %cst = arith.constant dense<0.000000e+00> : vector<8x32xf32>
    %6 = tpu.matmul %5, %4, %cst {dimension_numbers = #tpu.dot_dimension_numbers<[1], [0], [0], [1], [0, 0, 1, 1], [], []>} : vector<8x16xbf16>, vector<16x32xbf16>, vector<8x32xf32> -> vector<8x32xf32>
    %c0_9 = arith.constant 0 : index
    %c0_10 = arith.constant 0 : index
    %c0_11 = arith.constant 0 : index
    %7 = vector.load %arg5[%c0_9, %c0_10, %c0_11] : memref<3x1x32xf32, #tpu.memory_space<vmem>>, vector<1x1x32xf32>
    %8 = vector.shape_cast %7 : vector<1x1x32xf32> to vector<1x32xf32>
    %9 = vector.broadcast %8 : vector<1x32xf32> to vector<8x32xf32>
    %10 = arith.addf %6, %9 : vector<8x32xf32>
    %c1 = arith.constant 1 : index
    %c0_12 = arith.constant 0 : index
    %c0_13 = arith.constant 0 : index
    %11 = vector.load %arg3[%c1, %c0_12, %c0_13] : memref<3x16x32xbf16, #tpu.memory_space<vmem>>, vector<1x16x32xbf16>
    %12 = vector.shape_cast %11 : vector<1x16x32xbf16> to vector<16x32xbf16>
    %13 = arith.truncf %0 : vector<8x16xf32> to vector<8x16xbf16>
    %cst_14 = arith.constant dense<0.000000e+00> : vector<8x32xf32>
    %14 = tpu.matmul %13, %12, %cst_14 {dimension_numbers = #tpu.dot_dimension_numbers<[1], [0], [0], [1], [0, 0, 1, 1], [], []>} : vector<8x16xbf16>, vector<16x32xbf16>, vector<8x32xf32> -> vector<8x32xf32>
    %c1_15 = arith.constant 1 : index
    %c0_16 = arith.constant 0 : index
    %c0_17 = arith.constant 0 : index
    %15 = vector.load %arg5[%c1_15, %c0_16, %c0_17] : memref<3x1x32xf32, #tpu.memory_space<vmem>>, vector<1x1x32xf32>
    %16 = vector.shape_cast %15 : vector<1x1x32xf32> to vector<1x32xf32>
    %17 = vector.broadcast %16 : vector<1x32xf32> to vector<8x32xf32>
    %18 = arith.addf %14, %17 : vector<8x32xf32>
    %c2 = arith.constant 2 : index
    %c0_18 = arith.constant 0 : index
    %c0_19 = arith.constant 0 : index
    %19 = vector.load %arg3[%c2, %c0_18, %c0_19] : memref<3x16x32xbf16, #tpu.memory_space<vmem>>, vector<1x16x32xbf16>
    %20 = vector.shape_cast %19 : vector<1x16x32xbf16> to vector<16x32xbf16>
    %21 = arith.truncf %0 : vector<8x16xf32> to vector<8x16xbf16>
    %cst_20 = arith.constant dense<0.000000e+00> : vector<8x32xf32>
    %22 = tpu.matmul %21, %20, %cst_20 {dimension_numbers = #tpu.dot_dimension_numbers<[1], [0], [0], [1], [0, 0, 1, 1], [], []>} : vector<8x16xbf16>, vector<16x32xbf16>, vector<8x32xf32> -> vector<8x32xf32>
    %c2_21 = arith.constant 2 : index
    %c0_22 = arith.constant 0 : index
    %c0_23 = arith.constant 0 : index
    %23 = vector.load %arg5[%c2_21, %c0_22, %c0_23] : memref<3x1x32xf32, #tpu.memory_space<vmem>>, vector<1x1x32xf32>
    %24 = vector.shape_cast %23 : vector<1x1x32xf32> to vector<1x32xf32>
    %25 = vector.broadcast %24 : vector<1x32xf32> to vector<8x32xf32>
    %26 = arith.addf %22, %25 : vector<8x32xf32>
    %c0_24 = arith.constant 0 : index
    %c0_25 = arith.constant 0 : index
    %c0_26 = arith.constant 0 : index
    %27 = vector.load %arg4[%c0_24, %c0_25, %c0_26] : memref<3x32x32xbf16, #tpu.memory_space<vmem>>, vector<1x32x32xbf16>
    %28 = vector.shape_cast %27 : vector<1x32x32xbf16> to vector<32x32xbf16>
    %29 = arith.truncf %1 : vector<8x32xf32> to vector<8x32xbf16>
    %cst_27 = arith.constant dense<0.000000e+00> : vector<8x32xf32>
    %30 = tpu.matmul %29, %28, %cst_27 {dimension_numbers = #tpu.dot_dimension_numbers<[1], [0], [0], [1], [0, 0, 1, 1], [], []>} : vector<8x32xbf16>, vector<32x32xbf16>, vector<8x32xf32> -> vector<8x32xf32>
    %c0_28 = arith.constant 0 : index
    %c0_29 = arith.constant 0 : index
    %c0_30 = arith.constant 0 : index
    %31 = vector.load %arg6[%c0_28, %c0_29, %c0_30] : memref<3x1x32xf32, #tpu.memory_space<vmem>>, vector<1x1x32xf32>
    %32 = vector.shape_cast %31 : vector<1x1x32xf32> to vector<1x32xf32>
    %33 = vector.broadcast %32 : vector<1x32xf32> to vector<8x32xf32>
    %34 = arith.addf %30, %33 : vector<8x32xf32>
    %c1_31 = arith.constant 1 : index
    %c0_32 = arith.constant 0 : index
    %c0_33 = arith.constant 0 : index
    %35 = vector.load %arg4[%c1_31, %c0_32, %c0_33] : memref<3x32x32xbf16, #tpu.memory_space<vmem>>, vector<1x32x32xbf16>
    %36 = vector.shape_cast %35 : vector<1x32x32xbf16> to vector<32x32xbf16>
    %37 = arith.truncf %1 : vector<8x32xf32> to vector<8x32xbf16>
    %cst_34 = arith.constant dense<0.000000e+00> : vector<8x32xf32>
    %38 = tpu.matmul %37, %36, %cst_34 {dimension_numbers = #tpu.dot_dimension_numbers<[1], [0], [0], [1], [0, 0, 1, 1], [], []>} : vector<8x32xbf16>, vector<32x32xbf16>, vector<8x32xf32> -> vector<8x32xf32>
    %c1_35 = arith.constant 1 : index
    %c0_36 = arith.constant 0 : index
    %c0_37 = arith.constant 0 : index
    %39 = vector.load %arg6[%c1_35, %c0_36, %c0_37] : memref<3x1x32xf32, #tpu.memory_space<vmem>>, vector<1x1x32xf32>
    %40 = vector.shape_cast %39 : vector<1x1x32xf32> to vector<1x32xf32>
    %41 = vector.broadcast %40 : vector<1x32xf32> to vector<8x32xf32>
    %42 = arith.addf %38, %41 : vector<8x32xf32>
    %c2_38 = arith.constant 2 : index
    %c0_39 = arith.constant 0 : index
    %c0_40 = arith.constant 0 : index
    %43 = vector.load %arg4[%c2_38, %c0_39, %c0_40] : memref<3x32x32xbf16, #tpu.memory_space<vmem>>, vector<1x32x32xbf16>
    %44 = vector.shape_cast %43 : vector<1x32x32xbf16> to vector<32x32xbf16>
    %45 = arith.truncf %1 : vector<8x32xf32> to vector<8x32xbf16>
    %cst_41 = arith.constant dense<0.000000e+00> : vector<8x32xf32>
    %46 = tpu.matmul %45, %44, %cst_41 {dimension_numbers = #tpu.dot_dimension_numbers<[1], [0], [0], [1], [0, 0, 1, 1], [], []>} : vector<8x32xbf16>, vector<32x32xbf16>, vector<8x32xf32> -> vector<8x32xf32>
    %c2_42 = arith.constant 2 : index
    %c0_43 = arith.constant 0 : index
    %c0_44 = arith.constant 0 : index
    %47 = vector.load %arg6[%c2_42, %c0_43, %c0_44] : memref<3x1x32xf32, #tpu.memory_space<vmem>>, vector<1x1x32xf32>
    %48 = vector.shape_cast %47 : vector<1x1x32xf32> to vector<1x32xf32>
    %49 = vector.broadcast %48 : vector<1x32xf32> to vector<8x32xf32>
    %50 = arith.addf %46, %49 : vector<8x32xf32>
    %51 = arith.addf %10, %34 : vector<8x32xf32>
    %52 = arith.negf %51 : vector<8x32xf32>
    %53 = math.exp %52 : vector<8x32xf32>
    %cst_45 = arith.constant 1.000000e+00 : f32
    %54 = vector.broadcast %cst_45 : f32 to vector<8x32xf32>
    %55 = arith.addf %54, %53 : vector<8x32xf32>
    %56 = arith.divf %54, %55 : vector<8x32xf32>
    %57 = arith.addf %18, %42 : vector<8x32xf32>
    %58 = arith.negf %57 : vector<8x32xf32>
    %59 = math.exp %58 : vector<8x32xf32>
    %cst_46 = arith.constant 1.000000e+00 : f32
    %60 = vector.broadcast %cst_46 : f32 to vector<8x32xf32>
    %61 = arith.addf %60, %59 : vector<8x32xf32>
    %62 = arith.divf %60, %61 : vector<8x32xf32>
    %63 = arith.mulf %56, %50 : vector<8x32xf32>
    %64 = arith.addf %26, %63 : vector<8x32xf32>
    %65 = math.tanh %64 : vector<8x32xf32>
    %cst_47 = arith.constant 1.000000e+00 : f32
    %66 = vector.broadcast %cst_47 : f32 to vector<8x32xf32>
    %67 = arith.subf %66, %62 : vector<8x32xf32>
    %68 = arith.mulf %67, %65 : vector<8x32xf32>
    %69 = arith.mulf %62, %1 : vector<8x32xf32>
    %70 = arith.addf %68, %69 : vector<8x32xf32>
    %71 = vector.shape_cast %70 : vector<8x32xf32> to vector<8x1x32xf32>
    %72 = arith.extf %2 : vector<8x8x32xbf16> to vector<8x8x32xf32>
    %73 = vector.broadcast %71 : vector<8x1x32xf32> to vector<8x8x32xf32>
    %74 = arith.mulf %73, %72 : vector<8x8x32xf32>
    %cst_48 = arith.constant dense<0.000000e+00> : vector<8x8xf32>
    %75 = vector.multi_reduction <add>, %74, %cst_48 [2] : vector<8x8x32xf32> to vector<8x8xf32>
    %cst_49 = arith.constant dense<0xFF800000> : vector<8xf32>
    %76 = vector.multi_reduction <maximumf>, %75, %cst_49 [1] : vector<8x8xf32> to vector<8xf32>
    %77 = vector.shape_cast %76 : vector<8xf32> to vector<8x1xf32>
    %78 = vector.broadcast %77 : vector<8x1xf32> to vector<8x8xf32>
    %79 = arith.subf %75, %78 : vector<8x8xf32>
    %80 = math.exp %79 : vector<8x8xf32>
    %cst_50 = arith.constant dense<0.000000e+00> : vector<8xf32>
    %81 = vector.multi_reduction <add>, %80, %cst_50 [1] : vector<8x8xf32> to vector<8xf32>
    %82 = vector.shape_cast %81 : vector<8xf32> to vector<8x1xf32>
    %83 = vector.broadcast %82 : vector<8x1xf32> to vector<8x8xf32>
    %84 = arith.divf %80, %83 : vector<8x8xf32>
    %85 = vector.shape_cast %84 : vector<8x8xf32> to vector<8x8x1xf32>
    %86 = arith.extf %2 : vector<8x8x32xbf16> to vector<8x8x32xf32>
    %87 = vector.broadcast %85 : vector<8x8x1xf32> to vector<8x8x32xf32>
    %88 = arith.mulf %87, %86 : vector<8x8x32xf32>
    %cst_51 = arith.constant dense<0.000000e+00> : vector<8x32xf32>
    %89 = vector.multi_reduction <add>, %88, %cst_51 [1] : vector<8x8x32xf32> to vector<8x32xf32>
    %c0_52 = arith.constant 0 : index
    %c0_53 = arith.constant 0 : index
    %c0_54 = arith.constant 0 : index
    %90 = vector.load %arg7[%c0_52, %c0_53, %c0_54] : memref<3x16x32xbf16, #tpu.memory_space<vmem>>, vector<1x16x32xbf16>
    %91 = vector.shape_cast %90 : vector<1x16x32xbf16> to vector<16x32xbf16>
    %92 = arith.truncf %0 : vector<8x16xf32> to vector<8x16xbf16>
    %cst_55 = arith.constant dense<0.000000e+00> : vector<8x32xf32>
    %93 = tpu.matmul %92, %91, %cst_55 {dimension_numbers = #tpu.dot_dimension_numbers<[1], [0], [0], [1], [0, 0, 1, 1], [], []>} : vector<8x16xbf16>, vector<16x32xbf16>, vector<8x32xf32> -> vector<8x32xf32>
    %c0_56 = arith.constant 0 : index
    %c0_57 = arith.constant 0 : index
    %c0_58 = arith.constant 0 : index
    %94 = vector.load %arg8[%c0_56, %c0_57, %c0_58] : memref<3x32x32xbf16, #tpu.memory_space<vmem>>, vector<1x32x32xbf16>
    %95 = vector.shape_cast %94 : vector<1x32x32xbf16> to vector<32x32xbf16>
    %96 = arith.truncf %89 : vector<8x32xf32> to vector<8x32xbf16>
    %cst_59 = arith.constant dense<0.000000e+00> : vector<8x32xf32>
    %97 = tpu.matmul %96, %95, %cst_59 {dimension_numbers = #tpu.dot_dimension_numbers<[1], [0], [0], [1], [0, 0, 1, 1], [], []>} : vector<8x32xbf16>, vector<32x32xbf16>, vector<8x32xf32> -> vector<8x32xf32>
    %98 = arith.addf %93, %97 : vector<8x32xf32>
    %c0_60 = arith.constant 0 : index
    %c0_61 = arith.constant 0 : index
    %c0_62 = arith.constant 0 : index
    %99 = vector.load %arg10[%c0_60, %c0_61, %c0_62] : memref<3x1x32xf32, #tpu.memory_space<vmem>>, vector<1x1x32xf32>
    %100 = vector.shape_cast %99 : vector<1x1x32xf32> to vector<1x32xf32>
    %101 = vector.broadcast %100 : vector<1x32xf32> to vector<8x32xf32>
    %102 = arith.addf %98, %101 : vector<8x32xf32>
    %c1_63 = arith.constant 1 : index
    %c0_64 = arith.constant 0 : index
    %c0_65 = arith.constant 0 : index
    %103 = vector.load %arg7[%c1_63, %c0_64, %c0_65] : memref<3x16x32xbf16, #tpu.memory_space<vmem>>, vector<1x16x32xbf16>
    %104 = vector.shape_cast %103 : vector<1x16x32xbf16> to vector<16x32xbf16>
    %105 = arith.truncf %0 : vector<8x16xf32> to vector<8x16xbf16>
    %cst_66 = arith.constant dense<0.000000e+00> : vector<8x32xf32>
    %106 = tpu.matmul %105, %104, %cst_66 {dimension_numbers = #tpu.dot_dimension_numbers<[1], [0], [0], [1], [0, 0, 1, 1], [], []>} : vector<8x16xbf16>, vector<16x32xbf16>, vector<8x32xf32> -> vector<8x32xf32>
    %c1_67 = arith.constant 1 : index
    %c0_68 = arith.constant 0 : index
    %c0_69 = arith.constant 0 : index
    %107 = vector.load %arg8[%c1_67, %c0_68, %c0_69] : memref<3x32x32xbf16, #tpu.memory_space<vmem>>, vector<1x32x32xbf16>
    %108 = vector.shape_cast %107 : vector<1x32x32xbf16> to vector<32x32xbf16>
    %109 = arith.truncf %89 : vector<8x32xf32> to vector<8x32xbf16>
    %cst_70 = arith.constant dense<0.000000e+00> : vector<8x32xf32>
    %110 = tpu.matmul %109, %108, %cst_70 {dimension_numbers = #tpu.dot_dimension_numbers<[1], [0], [0], [1], [0, 0, 1, 1], [], []>} : vector<8x32xbf16>, vector<32x32xbf16>, vector<8x32xf32> -> vector<8x32xf32>
    %111 = arith.addf %106, %110 : vector<8x32xf32>
    %c1_71 = arith.constant 1 : index
    %c0_72 = arith.constant 0 : index
    %c0_73 = arith.constant 0 : index
    %112 = vector.load %arg10[%c1_71, %c0_72, %c0_73] : memref<3x1x32xf32, #tpu.memory_space<vmem>>, vector<1x1x32xf32>
    %113 = vector.shape_cast %112 : vector<1x1x32xf32> to vector<1x32xf32>
    %114 = vector.broadcast %113 : vector<1x32xf32> to vector<8x32xf32>
    %115 = arith.addf %111, %114 : vector<8x32xf32>
    %c2_74 = arith.constant 2 : index
    %c0_75 = arith.constant 0 : index
    %c0_76 = arith.constant 0 : index
    %116 = vector.load %arg7[%c2_74, %c0_75, %c0_76] : memref<3x16x32xbf16, #tpu.memory_space<vmem>>, vector<1x16x32xbf16>
    %117 = vector.shape_cast %116 : vector<1x16x32xbf16> to vector<16x32xbf16>
    %118 = arith.truncf %0 : vector<8x16xf32> to vector<8x16xbf16>
    %cst_77 = arith.constant dense<0.000000e+00> : vector<8x32xf32>
    %119 = tpu.matmul %118, %117, %cst_77 {dimension_numbers = #tpu.dot_dimension_numbers<[1], [0], [0], [1], [0, 0, 1, 1], [], []>} : vector<8x16xbf16>, vector<16x32xbf16>, vector<8x32xf32> -> vector<8x32xf32>
    %c2_78 = arith.constant 2 : index
    %c0_79 = arith.constant 0 : index
    %c0_80 = arith.constant 0 : index
    %120 = vector.load %arg8[%c2_78, %c0_79, %c0_80] : memref<3x32x32xbf16, #tpu.memory_space<vmem>>, vector<1x32x32xbf16>
    %121 = vector.shape_cast %120 : vector<1x32x32xbf16> to vector<32x32xbf16>
    %122 = arith.truncf %89 : vector<8x32xf32> to vector<8x32xbf16>
    %cst_81 = arith.constant dense<0.000000e+00> : vector<8x32xf32>
    %123 = tpu.matmul %122, %121, %cst_81 {dimension_numbers = #tpu.dot_dimension_numbers<[1], [0], [0], [1], [0, 0, 1, 1], [], []>} : vector<8x32xbf16>, vector<32x32xbf16>, vector<8x32xf32> -> vector<8x32xf32>
    %124 = arith.addf %119, %123 : vector<8x32xf32>
    %c2_82 = arith.constant 2 : index
    %c0_83 = arith.constant 0 : index
    %c0_84 = arith.constant 0 : index
    %125 = vector.load %arg10[%c2_82, %c0_83, %c0_84] : memref<3x1x32xf32, #tpu.memory_space<vmem>>, vector<1x1x32xf32>
    %126 = vector.shape_cast %125 : vector<1x1x32xf32> to vector<1x32xf32>
    %127 = vector.broadcast %126 : vector<1x32xf32> to vector<8x32xf32>
    %128 = arith.addf %124, %127 : vector<8x32xf32>
    %c0_85 = arith.constant 0 : index
    %c0_86 = arith.constant 0 : index
    %c0_87 = arith.constant 0 : index
    %129 = vector.load %arg9[%c0_85, %c0_86, %c0_87] : memref<3x32x32xbf16, #tpu.memory_space<vmem>>, vector<1x32x32xbf16>
    %130 = vector.shape_cast %129 : vector<1x32x32xbf16> to vector<32x32xbf16>
    %131 = arith.truncf %70 : vector<8x32xf32> to vector<8x32xbf16>
    %cst_88 = arith.constant dense<0.000000e+00> : vector<8x32xf32>
    %132 = tpu.matmul %131, %130, %cst_88 {dimension_numbers = #tpu.dot_dimension_numbers<[1], [0], [0], [1], [0, 0, 1, 1], [], []>} : vector<8x32xbf16>, vector<32x32xbf16>, vector<8x32xf32> -> vector<8x32xf32>
    %c0_89 = arith.constant 0 : index
    %c0_90 = arith.constant 0 : index
    %c0_91 = arith.constant 0 : index
    %133 = vector.load %arg11[%c0_89, %c0_90, %c0_91] : memref<3x1x32xf32, #tpu.memory_space<vmem>>, vector<1x1x32xf32>
    %134 = vector.shape_cast %133 : vector<1x1x32xf32> to vector<1x32xf32>
    %135 = vector.broadcast %134 : vector<1x32xf32> to vector<8x32xf32>
    %136 = arith.addf %132, %135 : vector<8x32xf32>
    %c1_92 = arith.constant 1 : index
    %c0_93 = arith.constant 0 : index
    %c0_94 = arith.constant 0 : index
    %137 = vector.load %arg9[%c1_92, %c0_93, %c0_94] : memref<3x32x32xbf16, #tpu.memory_space<vmem>>, vector<1x32x32xbf16>
    %138 = vector.shape_cast %137 : vector<1x32x32xbf16> to vector<32x32xbf16>
    %139 = arith.truncf %70 : vector<8x32xf32> to vector<8x32xbf16>
    %cst_95 = arith.constant dense<0.000000e+00> : vector<8x32xf32>
    %140 = tpu.matmul %139, %138, %cst_95 {dimension_numbers = #tpu.dot_dimension_numbers<[1], [0], [0], [1], [0, 0, 1, 1], [], []>} : vector<8x32xbf16>, vector<32x32xbf16>, vector<8x32xf32> -> vector<8x32xf32>
    %c1_96 = arith.constant 1 : index
    %c0_97 = arith.constant 0 : index
    %c0_98 = arith.constant 0 : index
    %141 = vector.load %arg11[%c1_96, %c0_97, %c0_98] : memref<3x1x32xf32, #tpu.memory_space<vmem>>, vector<1x1x32xf32>
    %142 = vector.shape_cast %141 : vector<1x1x32xf32> to vector<1x32xf32>
    %143 = vector.broadcast %142 : vector<1x32xf32> to vector<8x32xf32>
    %144 = arith.addf %140, %143 : vector<8x32xf32>
    %c2_99 = arith.constant 2 : index
    %c0_100 = arith.constant 0 : index
    %c0_101 = arith.constant 0 : index
    %145 = vector.load %arg9[%c2_99, %c0_100, %c0_101] : memref<3x32x32xbf16, #tpu.memory_space<vmem>>, vector<1x32x32xbf16>
    %146 = vector.shape_cast %145 : vector<1x32x32xbf16> to vector<32x32xbf16>
    %147 = arith.truncf %70 : vector<8x32xf32> to vector<8x32xbf16>
    %cst_102 = arith.constant dense<0.000000e+00> : vector<8x32xf32>
    %148 = tpu.matmul %147, %146, %cst_102 {dimension_numbers = #tpu.dot_dimension_numbers<[1], [0], [0], [1], [0, 0, 1, 1], [], []>} : vector<8x32xbf16>, vector<32x32xbf16>, vector<8x32xf32> -> vector<8x32xf32>
    %c2_103 = arith.constant 2 : index
    %c0_104 = arith.constant 0 : index
    %c0_105 = arith.constant 0 : index
    %149 = vector.load %arg11[%c2_103, %c0_104, %c0_105] : memref<3x1x32xf32, #tpu.memory_space<vmem>>, vector<1x1x32xf32>
    %150 = vector.shape_cast %149 : vector<1x1x32xf32> to vector<1x32xf32>
    %151 = vector.broadcast %150 : vector<1x32xf32> to vector<8x32xf32>
    %152 = arith.addf %148, %151 : vector<8x32xf32>
    %153 = arith.addf %102, %136 : vector<8x32xf32>
    %154 = arith.negf %153 : vector<8x32xf32>
    %155 = math.exp %154 : vector<8x32xf32>
    %cst_106 = arith.constant 1.000000e+00 : f32
    %156 = vector.broadcast %cst_106 : f32 to vector<8x32xf32>
    %157 = arith.addf %156, %155 : vector<8x32xf32>
    %158 = arith.divf %156, %157 : vector<8x32xf32>
    %159 = arith.addf %115, %144 : vector<8x32xf32>
    %160 = arith.negf %159 : vector<8x32xf32>
    %161 = math.exp %160 : vector<8x32xf32>
    %cst_107 = arith.constant 1.000000e+00 : f32
    %162 = vector.broadcast %cst_107 : f32 to vector<8x32xf32>
    %163 = arith.addf %162, %161 : vector<8x32xf32>
    %164 = arith.divf %162, %163 : vector<8x32xf32>
    %165 = arith.mulf %158, %152 : vector<8x32xf32>
    %166 = arith.addf %128, %165 : vector<8x32xf32>
    %167 = math.tanh %166 : vector<8x32xf32>
    %cst_108 = arith.constant 1.000000e+00 : f32
    %168 = vector.broadcast %cst_108 : f32 to vector<8x32xf32>
    %169 = arith.subf %168, %164 : vector<8x32xf32>
    %170 = arith.mulf %169, %167 : vector<8x32xf32>
    %171 = arith.mulf %164, %70 : vector<8x32xf32>
    %172 = arith.addf %170, %171 : vector<8x32xf32>
    %c0_109 = arith.constant 0 : index
    %c0_110 = arith.constant 0 : index
    %173 = vector.load %arg12[%c0_109, %c0_110] : memref<8x32xf32, #tpu.memory_space<vmem>>, vector<8x32xf32>
    tpu.vector_store %arg12[%c0_109, %c0_110], %172 {strides = array<i32>} : memref<8x32xf32, #tpu.memory_space<vmem>>, vector<8x32xf32>,
    %c0_111 = arith.constant 0 : index
    %c0_112 = arith.constant 0 : index
    %174 = vector.load %arg13[%c0_111, %c0_112] : memref<8x32xf32, #tpu.memory_space<vmem>>, vector<8x32xf32>
    tpu.vector_store %arg13[%c0_111, %c0_112], %89 {strides = array<i32>} : memref<8x32xf32, #tpu.memory_space<vmem>>, vector<8x32xf32>,
    return
  }
}

</mosaic_0001>

<llo_original>
// kernel: tpu_custom_call.1
$region0: #{tpu_custom_call.1}
  #allocation0 [shape = 'u32[]', space=smem, size = 0x4, offset = 0x4, fixed_abs, tag = 'smem constant byte address 0x4 - core index']
  #allocation1 [shape = 'u32[144,128]{1,0:T(1,128)}', space=vmem, size = 0x12000, scoped, tag = 'internal scratch']
  %s0 = inlined_call_operand.hbm [shape: f32[8,16], index: 0, kind: input, shape index: {}]
  %s1 = inlined_call_operand.hbm [shape: f32[8,32], index: 1, kind: input, shape index: {}]
  %s2 = inlined_call_operand.hbm [shape: bf16[8,8,32], index: 2, kind: input, shape index: {}]
  %s3 = inlined_call_operand.hbm [shape: bf16[3,16,32], index: 3, kind: input, shape index: {}]
  %s4 = inlined_call_operand.hbm [shape: bf16[3,32,32], index: 4, kind: input, shape index: {}]
  %s5 = inlined_call_operand.hbm [shape: f32[3,1,32], index: 5, kind: input, shape index: {}]
  %s6 = inlined_call_operand.hbm [shape: f32[3,1,32], index: 6, kind: input, shape index: {}]
  %s7 = inlined_call_operand.vmem [shape: bf16[3,16,32], index: 7, kind: input, shape index: {}]
  %s8 = inlined_call_operand.hbm [shape: bf16[3,32,32], index: 8, kind: input, shape index: {}]
  %s9 = inlined_call_operand.hbm [shape: bf16[3,32,32], index: 9, kind: input, shape index: {}]
  %s10 = inlined_call_operand.vmem [shape: f32[3,1,32], index: 10, kind: input, shape index: {}]
  %s11 = inlined_call_operand.vmem [shape: f32[3,1,32], index: 11, kind: input, shape index: {}]
  %s12 = inlined_call_operand.hbm [shape: f32[8,32], index: 12, kind: output, shape index: {0}]
  %s13 = inlined_call_operand.hbm [shape: f32[8,32], index: 13, kind: output, shape index: {1}]
  %14 = xla_tuple %s12, %s13
  %s15 = sld [smem:[#allocation0]]
  $region102: #{tpu_custom_call.1} parent=0
    _
  %s17 = ssub.s32 1, %s15
  %s18 = scalar_select 0, %s17, %s15
  $region1: #{tpu_custom_call.1} parent=0
    #allocation2 [shape = 'u8[4096]{0}', space=vmem, size = 0x1000, scoped, tag = 'input window, operand 0, single buffered']
    #allocation3 [shape = 's32[1]{0}', space=sflag, size = 0x4, scoped, tag = 'scoped memory for tpu_custom_call.1']
    #allocation4 [shape = 's32[1]{0}', space=sflag, size = 0x4, scoped, tag = 'scoped memory for tpu_custom_call.1']
    #allocation5 [shape = 'u8[4096]{0}', space=vmem, size = 0x1000, scoped, tag = 'input window, operand 1, single buffered']
    #allocation6 [shape = 's32[1]{0}', space=sflag, size = 0x4, scoped, tag = 'scoped memory for tpu_custom_call.1']
    #allocation7 [shape = 'u8[16384]{0}', space=vmem, size = 0x4000, scoped, tag = 'input window, operand 2, single buffered']
    #allocation8 [shape = 'u8[12288]{0}', space=vmem, size = 0x3000, scoped, tag = 'input window, operand 3, single buffered']
    #allocation9 [shape = 's32[1]{0}', space=sflag, size = 0x4, scoped, tag = 'scoped memory for tpu_custom_call.1']
    #allocation10 [shape = 'u8[24576]{0}', space=vmem, size = 0x6000, scoped, tag = 'input window, operand 4, single buffered']
    #allocation11 [shape = 'u8[1536]{0}', space=vmem, size = 0x800, scoped, tag = 'input window, operand 5, single buffered']
    #allocation12 [shape = 's32[1]{0}', space=sflag, size = 0x4, scoped, tag = 'scoped memory for tpu_custom_call.1']
    #allocation13 [shape = 'u8[1536]{0}', space=vmem, size = 0x800, scoped, tag = 'input window, operand 6, single buffered']
    #allocation14 [shape = 'u8[24576]{0}', space=vmem, size = 0x6000, scoped, tag = 'input window, operand 8, single buffered']
    #allocation15 [shape = 's32[1]{0}', space=sflag, size = 0x4, scoped, tag = 'scoped memory for tpu_custom_call.1']
    #allocation16 [shape = 'u8[24576]{0}', space=vmem, size = 0x6000, scoped, tag = 'input window, operand 9, single buffered']
    #allocation17 [shape = 'u8[4096]{0}', space=vmem, size = 0x1000, scoped, tag = 'output window, operand 0, single buffered']
    #allocation18 [shape = 'u8[4096]{0}', space=vmem, size = 0x1000, scoped, tag = 'output window, operand 1, single buffered']
    #allocation19 [shape = 's32[1]{0}', space=sflag, size = 0x4, scoped, tag = 'scoped memory for tpu_custom_call.1']
    %19 = vsyncpa [#allocation3], 0
    %20 = vsyncpa [#allocation6], 0
    %21 = vsyncpa [#allocation9], 0
    %22 = vsyncpa [#allocation12], 0
    %23 = vsyncpa [#allocation15], 0
    %24 = vsyncpa [#allocation4], 0
    %25 = vsyncpa [#allocation19], 0
    // Predicated region
    $region2: #{tpu_custom_call.1} parent=1 // pred_check
      _
    $region3: #{tpu_custom_call.1} parent=1 // pred_check_branch
      %27 = sbr.rel (0) target = $region5
    $region4: #{tpu_custom_call.1} parent=1 // pred_region
      %s29 = ssub.s32 128, 128
      %30 = vsyncadd [#allocation3], %s29
      %s32 = sshll.u32 [#allocation2], 4
      %s33 = int_to_ptr.vmem [resolvable:$true] %s32
      %35 = dma.hbm_to_vmem [thread:$0]  %s0, 128, %s33, [#allocation3]
    $region5: #{tpu_custom_call.1} parent=1 // pred_fallthru
      _
    // Predicated region
    $region6: #{tpu_custom_call.1} parent=1 // pred_check
      _
    $region7: #{tpu_custom_call.1} parent=1 // pred_check_branch
      %37 = sbr.rel (0) target = $region9
    $region8: #{tpu_custom_call.1} parent=1 // pred_region
      %s39 = ssub.s32 128, 128
      %40 = vsyncadd [#allocation6], %s39
      %s42 = sshll.u32 [#allocation5], 4
      %s43 = int_to_ptr.vmem [resolvable:$true] %s42
      %45 = dma.hbm_to_vmem [thread:$0]  %s1, 128, %s43, [#allocation6]
    $region9: #{tpu_custom_call.1} parent=1 // pred_fallthru
      _
    // Predicated region
    $region10: #{tpu_custom_call.1} parent=1 // pred_check
      _
    $region11: #{tpu_custom_call.1} parent=1 // pred_check_branch
      %47 = sbr.rel (0) target = $region13
    $region12: #{tpu_custom_call.1} parent=1 // pred_region
      %s49 = ssub.s32 512, 512
      %50 = vsyncadd [#allocation6], %s49
      %s51 = sshll.u32 [#allocation7], 4
      %s52 = int_to_ptr.vmem [resolvable:$true] %s51
      %57 = dma.hbm_to_vmem [thread:$0]  %s2, 512, %s52, [#allocation6], 64, 64, 4
    $region13: #{tpu_custom_call.1} parent=1 // pred_fallthru
      _
    // Predicated region
    $region14: #{tpu_custom_call.1} parent=1 // pred_check
      _
    $region15: #{tpu_custom_call.1} parent=1 // pred_check_branch
      %59 = sbr.rel (0) target = $region17
    $region16: #{tpu_custom_call.1} parent=1 // pred_region
      %s61 = ssub.s32 384, 384
      %62 = vsyncadd [#allocation9], %s61
      %s63 = sshll.u32 [#allocation8], 4
      %s64 = int_to_ptr.vmem [resolvable:$true] %s63
      %69 = dma.hbm_to_vmem [thread:$0]  %s3, 384, %s64, [#allocation9], 64, 64, 4
    $region17: #{tpu_custom_call.1} parent=1 // pred_fallthru
      _
    // Predicated region
    $region18: #{tpu_custom_call.1} parent=1 // pred_check
      _
    $region19: #{tpu_custom_call.1} parent=1 // pred_check_branch
      %71 = sbr.rel (0) target = $region21
    $region20: #{tpu_custom_call.1} parent=1 // pred_region
      %s73 = ssub.s32 768, 768
      %74 = vsyncadd [#allocation9], %s73
      %s75 = sshll.u32 [#allocation10], 4
      %s76 = int_to_ptr.vmem [resolvable:$true] %s75
      %81 = dma.hbm_to_vmem [thread:$0]  %s4, 768, %s76, [#allocation9], 64, 64, 4
    $region21: #{tpu_custom_call.1} parent=1 // pred_fallthru
      _
    // Predicated region
    $region22: #{tpu_custom_call.1} parent=1 // pred_check
      _
    $region23: #{tpu_custom_call.1} parent=1 // pred_check_branch
      %83 = sbr.rel (0) target = $region25
    $region24: #{tpu_custom_call.1} parent=1 // pred_region
      %s85 = ssub.s32 48, 48
      %86 = vsyncadd [#allocation12], %s85
      %s87 = sshll.u32 [#allocation11], 4
      %s88 = int_to_ptr.vmem [resolvable:$true] %s87
      %93 = dma.hbm_to_vmem [thread:$0]  %s5, 48, %s88, [#allocation12], 16, 16, 1
    $region25: #{tpu_custom_call.1} parent=1 // pred_fallthru
      _
    // Predicated region
    $region26: #{tpu_custom_call.1} parent=1 // pred_check
      _
    $region27: #{tpu_custom_call.1} parent=1 // pred_check_branch
      %95 = sbr.rel (0) target = $region29
    $region28: #{tpu_custom_call.1} parent=1 // pred_region
      %s97 = ssub.s32 48, 48
      %98 = vsyncadd [#allocation12], %s97
      %s99 = sshll.u32 [#allocation13], 4
      %s100 = int_to_ptr.vmem [resolvable:$true] %s99
      %105 = dma.hbm_to_vmem [thread:$0]  %s6, 48, %s100, [#allocation12], 16, 16, 1
    $region29: #{tpu_custom_call.1} parent=1 // pred_fallthru
      _
    // Predicated region
    $region30: #{tpu_custom_call.1} parent=1 // pred_check
      _
    $region31: #{tpu_custom_call.1} parent=1 // pred_check_branch
      %107 = sbr.rel (0) target = $region33
    $region32: #{tpu_custom_call.1} parent=1 // pred_region
      _
    $region33: #{tpu_custom_call.1} parent=1 // pred_fallthru
      _
    // Predicated region
    $region34: #{tpu_custom_call.1} parent=1 // pred_check
      _
    $region35: #{tpu_custom_call.1} parent=1 // pred_check_branch
      %109 = sbr.rel (0) target = $region37
    $region36: #{tpu_custom_call.1} parent=1 // pred_region
      %s111 = ssub.s32 768, 768
      %112 = vsyncadd [#allocation15], %s111
      %s113 = sshll.u32 [#allocation14], 4
      %s114 = int_to_ptr.vmem [resolvable:$true] %s113
      %119 = dma.hbm_to_vmem [thread:$0]  %s8, 768, %s114, [#allocation15], 64, 64, 4
    $region37: #{tpu_custom_call.1} parent=1 // pred_fallthru
      _
    // Predicated region
    $region38: #{tpu_custom_call.1} parent=1 // pred_check
      _
    $region39: #{tpu_custom_call.1} parent=1 // pred_check_branch
      %121 = sbr.rel (0) target = $region41
    $region40: #{tpu_custom_call.1} parent=1 // pred_region
      %s123 = ssub.s32 768, 768
      %124 = vsyncadd [#allocation15], %s123
      %s125 = sshll.u32 [#allocation16], 4
      %s126 = int_to_ptr.vmem [resolvable:$true] %s125
      %131 = dma.hbm_to_vmem [thread:$0]  %s9, 768, %s126, [#allocation15], 64, 64, 4
    $region41: #{tpu_custom_call.1} parent=1 // pred_fallthru
      _
    // Predicated region
    $region42: #{tpu_custom_call.1} parent=1 // pred_check
      _
    $region43: #{tpu_custom_call.1} parent=1 // pred_check_branch
      %133 = sbr.rel (0) target = $region45
    $region44: #{tpu_custom_call.1} parent=1 // pred_region
      _
    $region45: #{tpu_custom_call.1} parent=1 // pred_fallthru
      _
    // Predicated region
    $region46: #{tpu_custom_call.1} parent=1 // pred_check
      _
    $region47: #{tpu_custom_call.1} parent=1 // pred_check_branch
      %135 = sbr.rel (0) target = $region49
    $region48: #{tpu_custom_call.1} parent=1 // pred_region
      _
    $region49: #{tpu_custom_call.1} parent=1 // pred_fallthru
      _
    // Predicated region
    $region50: #{tpu_custom_call.1} parent=1 // pred_check
      _
    $region51: #{tpu_custom_call.1} parent=1 // pred_check_branch
      %137 = sbr.rel (0) target = $region53
    $region52: #{tpu_custom_call.1} parent=1 // pred_region
      %138 = dma.done [#allocation3], 128
    $region53: #{tpu_custom_call.1} parent=1 // pred_fallthru
      _
    // Predicated region
    $region54: #{tpu_custom_call.1} parent=1 // pred_check
      _
    $region55: #{tpu_custom_call.1} parent=1 // pred_check_branch
      %140 = sbr.rel (0) target = $region57
    $region56: #{tpu_custom_call.1} parent=1 // pred_region
      %141 = dma.done [#allocation6], 128
    $region57: #{tpu_custom_call.1} parent=1 // pred_fallthru
      _
    // Predicated region
    $region58: #{tpu_custom_call.1} parent=1 // pred_check
      _
    $region59: #{tpu_custom_call.1} parent=1 // pred_check_branch
      %143 = sbr.rel (0) target = $region61
    $region60: #{tpu_custom_call.1} parent=1 // pred_region
      %144 = dma.done [#allocation6], 512
    $region61: #{tpu_custom_call.1} parent=1 // pred_fallthru
      _
    // Predicated region
    $region62: #{tpu_custom_call.1} parent=1 // pred_check
      _
    $region63: #{tpu_custom_call.1} parent=1 // pred_check_branch
      %146 = sbr.rel (0) target = $region65
    $region64: #{tpu_custom_call.1} parent=1 // pred_region
      %147 = dma.done [#allocation9], 384
    $region65: #{tpu_custom_call.1} parent=1 // pred_fallthru
      _
    // Predicated region
    $region66: #{tpu_custom_call.1} parent=1 // pred_check
      _
    $region67: #{tpu_custom_call.1} parent=1 // pred_check_branch
      %149 = sbr.rel (0) target = $region69
    $region68: #{tpu_custom_call.1} parent=1 // pred_region
      %150 = dma.done [#allocation9], 768
    $region69: #{tpu_custom_call.1} parent=1 // pred_fallthru
      _
    // Predicated region
    $region70: #{tpu_custom_call.1} parent=1 // pred_check
      _
    $region71: #{tpu_custom_call.1} parent=1 // pred_check_branch
      %152 = sbr.rel (0) target = $region73
    $region72: #{tpu_custom_call.1} parent=1 // pred_region
      %153 = dma.done [#allocation12], 48
    $region73: #{tpu_custom_call.1} parent=1 // pred_fallthru
      _
    // Predicated region
    $region74: #{tpu_custom_call.1} parent=1 // pred_check
      _
    $region75: #{tpu_custom_call.1} parent=1 // pred_check_branch
      %155 = sbr.rel (0) target = $region77
    $region76: #{tpu_custom_call.1} parent=1 // pred_region
      %156 = dma.done [#allocation12], 48
    $region77: #{tpu_custom_call.1} parent=1 // pred_fallthru
      _
    // Predicated region
    $region78: #{tpu_custom_call.1} parent=1 // pred_check
      _
    $region79: #{tpu_custom_call.1} parent=1 // pred_check_branch
      %158 = sbr.rel (0) target = $region81
    $region80: #{tpu_custom_call.1} parent=1 // pred_region
      %159 = dma.done [#allocation15], 768
    $region81: #{tpu_custom_call.1} parent=1 // pred_fallthru
      _
    // Predicated region
    $region82: #{tpu_custom_call.1} parent=1 // pred_check
      _
    $region83: #{tpu_custom_call.1} parent=1 // pred_check_branch
      %161 = sbr.rel (0) target = $region85
    $region84: #{tpu_custom_call.1} parent=1 // pred_region
      %162 = dma.done [#allocation15], 768
    $region85: #{tpu_custom_call.1} parent=1 // pred_fallthru
      _
    %v164 = vld [vmem:[#allocation2] sm:$0xff]
    %v165 = vld [vmem:[#allocation5] sm:$0xff]
    %v166 = vld [vmem:[#allocation7] sm:$0xf]
    %v167 = vld [vmem:[#allocation7 + $0x4] sm:$0xf]
    %v168 = vld [vmem:[#allocation7 + $0x8] sm:$0xf]
    %v169 = vld [vmem:[#allocation7 + $0xc] sm:$0xf]
    %v170 = vld [vmem:[#allocation7 + $0x10] sm:$0xf]
    %v171 = vld [vmem:[#allocation7 + $0x14] sm:$0xf]
    %v172 = vld [vmem:[#allocation7 + $0x18] sm:$0xf]
    %v173 = vld [vmem:[#allocation7 + $0x1c] sm:$0xf]
    %v174 = vld [vmem:[#allocation8] sm:$0xf]
    %v175 = vld [vmem:[#allocation8 + $0x4] sm:$0xf]
    %v176 = vpack.c.bf16 %v164, %v164
    %v177 = vld [vmem:[#allocation11] sm:$0x1]
    %v179 = vlaneseq
    %v180 = vshrl.u32 %v179, 7
    %v181 = vsub.s32 0, %v180
    %v182 = vrot.slane %v177, %v181
    %v186 = vunpack.c.l.b16 %v174
    %v187 = vunpack.c.l.b16 %v175
    %v188 = vpack.c.b16 %v187, %v186
    %vm190 = vcmask 130048
    %v192 = vsel %vm190, %v176, 0
    %194 = vmatprep.subr.bf16.mxu0 0
    %195 = vmatpush1.bf16.msra.mxu0 %v188
    %196 = vmatprep.subr.bf16.mxu0 0
    %197 = vmatpush1.bf16.msra.mxu0 0
    %198 = vmatprep.subr.bf16.mxu0 0
    %199 = vmatpush1.bf16.msra.mxu0 0
    %200 = vmatprep.subr.bf16.mxu0 0
    %201 = vmatpush1.bf16.msra.mxu0 0
    %202 = vmatprep.subr.bf16.mxu0 0
    %203 = vmatpush1.bf16.msra.mxu0 0
    %204 = vmatprep.subr.bf16.mxu0 0
    %205 = vmatpush1.bf16.msra.mxu0 0
    %206 = vmatprep.subr.bf16.mxu0 0
    %207 = vmatpush1.bf16.msra.mxu0 0
    %208 = vmatprep.subr.bf16.mxu0 0
    %209 = vmatpush1.bf16.msra.mxu0 0
    %210 = vmatprep.subr.bf16.mxu0 0
    %211 = vmatpush1.bf16.msra.mxu0 0
    %212 = vmatprep.subr.bf16.mxu0 0
    %213 = vmatpush1.bf16.msra.mxu0 0
    %214 = vmatprep.subr.bf16.mxu0 0
    %215 = vmatpush1.bf16.msra.mxu0 0
    %216 = vmatprep.subr.bf16.mxu0 0
    %217 = vmatpush1.bf16.msra.mxu0 0
    %218 = vmatprep.subr.bf16.mxu0 0
    %219 = vmatpush1.bf16.msra.mxu0 0
    %220 = vmatprep.subr.bf16.mxu0 0
    %221 = vmatpush1.bf16.msra.mxu0 0
    %222 = vmatprep.subr.bf16.mxu0 0
    %223 = vmatpush1.bf16.msra.mxu0 0
    %224 = vmatprep.subr.bf16.mxu0 0
    %225 = vmatpush1.bf16.msra.mxu0 0
    %226 = vmatprep.mubr.bf16.mxu0 0
    %227 = vmatmul.mubr.bf16.gmra.mrb[0].mxu0 %v192
    %v228 = vpop.f32.mrb[0].mxu0
    %v229 = vadd.f32 %v182, %v228
    %v230 = vpop.f32.mrb[0].mxu0
    %v231 = vpop.f32.mrb[0].mxu0
    %v232 = vpop.f32.mrb[0].mxu0
    %233 = vdwg.mxu0
    %s234 = scalar_lea.vmem [#allocation8], 8
    %v235 = vld [vmem:[%s234] sm:$0xf]
    %v236 = vld [vmem:[%s234 + $0x4] sm:$0xf]
    %s237 = scalar_lea.vmem [#allocation11], 1
    %v238 = vld [vmem:[%s237] sm:$0x1]
    %v240 = vlaneseq
    %v241 = vshrl.u32 %v240, 7
    %v242 = vsub.s32 0, %v241
    %v243 = vrot.slane %v238, %v242
    %v247 = vunpack.c.l.b16 %v235
    %v248 = vunpack.c.l.b16 %v236
    %v249 = vpack.c.b16 %v248, %v247
    %251 = vmatprep.subr.bf16.mxu0 0
    %252 = vmatpush1.bf16.msra.mxu0 %v249
    %253 = vmatprep.subr.bf16.mxu0 0
    %254 = vmatpush1.bf16.msra.mxu0 0
    %255 = vmatprep.subr.bf16.mxu0 0
    %256 = vmatpush1.bf16.msra.mxu0 0
    %257 = vmatprep.subr.bf16.mxu0 0
    %258 = vmatpush1.bf16.msra.mxu0 0
    %259 = vmatprep.subr.bf16.mxu0 0
    %260 = vmatpush1.bf16.msra.mxu0 0
    %261 = vmatprep.subr.bf16.mxu0 0
    %262 = vmatpush1.bf16.msra.mxu0 0
    %263 = vmatprep.subr.bf16.mxu0 0
    %264 = vmatpush1.bf16.msra.mxu0 0
    %265 = vmatprep.subr.bf16.mxu0 0
    %266 = vmatpush1.bf16.msra.mxu0 0
    %267 = vmatprep.subr.bf16.mxu0 0
    %268 = vmatpush1.bf16.msra.mxu0 0
    %269 = vmatprep.subr.bf16.mxu0 0
    %270 = vmatpush1.bf16.msra.mxu0 0
    %271 = vmatprep.subr.bf16.mxu0 0
    %272 = vmatpush1.bf16.msra.mxu0 0
    %273 = vmatprep.subr.bf16.mxu0 0
    %274 = vmatpush1.bf16.msra.mxu0 0
    %275 = vmatprep.subr.bf16.mxu0 0
    %276 = vmatpush1.bf16.msra.mxu0 0
    %277 = vmatprep.subr.bf16.mxu0 0
    %278 = vmatpush1.bf16.msra.mxu0 0
    %279 = vmatprep.subr.bf16.mxu0 0
    %280 = vmatpush1.bf16.msra.mxu0 0
    %281 = vmatprep.subr.bf16.mxu0 0
    %282 = vmatpush1.bf16.msra.mxu0 0
    %283 = vmatprep.mubr.bf16.mxu0 0
    %284 = vmatmul.mubr.bf16.gmra.mrb[0].mxu0 %v192
    %v285 = vpop.f32.mrb[0].mxu0
    %v286 = vadd.f32 %v243, %v285
    %v287 = vpop.f32.mrb[0].mxu0
    %v288 = vpop.f32.mrb[0].mxu0
    %v289 = vpop.f32.mrb[0].mxu0
    %290 = vdwg.mxu0
    %s291 = scalar_lea.vmem [#allocation8], 16
    %v292 = vld [vmem:[%s291] sm:$0xf]
    %v293 = vld [vmem:[%s291 + $0x4] sm:$0xf]
    %s294 = scalar_lea.vmem [#allocation11], 2
    %v295 = vld [vmem:[%s294] sm:$0x1]
    %v297 = vlaneseq
    %v298 = vshrl.u32 %v297, 7
    %v299 = vsub.s32 0, %v298
    %v300 = vrot.slane %v295, %v299
    %v304 = vunpack.c.l.b16 %v292
    %v305 = vunpack.c.l.b16 %v293
    %v306 = vpack.c.b16 %v305, %v304
    %308 = vmatprep.subr.bf16.mxu0 0
    %309 = vmatpush1.bf16.msra.mxu0 %v306
    %310 = vmatprep.subr.bf16.mxu0 0
    %311 = vmatpush1.bf16.msra.mxu0 0
    %312 = vmatprep.subr.bf16.mxu0 0
    %313 = vmatpush1.bf16.msra.mxu0 0
    %314 = vmatprep.subr.bf16.mxu0 0
    %315 = vmatpush1.bf16.msra.mxu0 0
    %316 = vmatprep.subr.bf16.mxu0 0
    %317 = vmatpush1.bf16.msra.mxu0 0
    %318 = vmatprep.subr.bf16.mxu0 0
    %319 = vmatpush1.bf16.msra.mxu0 0
    %320 = vmatprep.subr.bf16.mxu0 0
    %321 = vmatpush1.bf16.msra.mxu0 0
    %322 = vmatprep.subr.bf16.mxu0 0
    %323 = vmatpush1.bf16.msra.mxu0 0
    %324 = vmatprep.subr.bf16.mxu0 0
    %325 = vmatpush1.bf16.msra.mxu0 0
    %326 = vmatprep.subr.bf16.mxu0 0
    %327 = vmatpush1.bf16.msra.mxu0 0
    %328 = vmatprep.subr.bf16.mxu0 0
    %329 = vmatpush1.bf16.msra.mxu0 0
    %330 = vmatprep.subr.bf16.mxu0 0
    %331 = vmatpush1.bf16.msra.mxu0 0
    %332 = vmatprep.subr.bf16.mxu0 0
    %333 = vmatpush1.bf16.msra.mxu0 0
    %334 = vmatprep.subr.bf16.mxu0 0
    %335 = vmatpush1.bf16.msra.mxu0 0
    %336 = vmatprep.subr.bf16.mxu0 0
    %337 = vmatpush1.bf16.msra.mxu0 0
    %338 = vmatprep.subr.bf16.mxu0 0
    %339 = vmatpush1.bf16.msra.mxu0 0
    %340 = vmatprep.mubr.bf16.mxu0 0
    %341 = vmatmul.mubr.bf16.gmra.mrb[0].mxu0 %v192
    %v342 = vpop.f32.mrb[0].mxu0
    %v343 = vadd.f32 %v300, %v342
    %v344 = vpop.f32.mrb[0].mxu0
    %v345 = vpop.f32.mrb[0].mxu0
    %v346 = vpop.f32.mrb[0].mxu0
    %347 = vdwg.mxu0
    %v348 = vld [vmem:[#allocation10] sm:$0xf]
    %v349 = vld [vmem:[#allocation10 + $0x4] sm:$0xf]
    %v350 = vld [vmem:[#allocation10 + $0x8] sm:$0xf]
    %v351 = vld [vmem:[#allocation10 + $0xc] sm:$0xf]
    %v352 = vpack.c.bf16 %v165, %v165
    %v353 = vld [vmem:[#allocation13] sm:$0x1]
    %v355 = vlaneseq
    %v356 = vshrl.u32 %v355, 7
    %v357 = vsub.s32 0, %v356
    %v358 = vrot.slane %v353, %v357
    %v364 = vunpack.c.l.b16 %v348
    %v365 = vunpack.c.l.b16 %v349
    %v366 = vunpack.c.l.b16 %v350
    %v367 = vunpack.c.l.b16 %v351
    %v368 = vpack.c.b16 %v365, %v364
    %v369 = vpack.c.b16 %v367, %v366
    %vm372 = vcmask 261120
    %v374 = vsel %vm372, %v352, 0
    %376 = vmatprep.subr.bf16.mxu0 0
    %377 = vmatpush1.bf16.msra.mxu0 %v368
    %378 = vmatprep.subr.bf16.mxu0 0
    %379 = vmatpush1.bf16.msra.mxu0 %v369
    %380 = vmatprep.subr.bf16.mxu0 0
    %381 = vmatpush1.bf16.msra.mxu0 0
    %382 = vmatprep.subr.bf16.mxu0 0
    %383 = vmatpush1.bf16.msra.mxu0 0
    %384 = vmatprep.subr.bf16.mxu0 0
    %385 = vmatpush1.bf16.msra.mxu0 0
    %386 = vmatprep.subr.bf16.mxu0 0
    %387 = vmatpush1.bf16.msra.mxu0 0
    %388 = vmatprep.subr.bf16.mxu0 0
    %389 = vmatpush1.bf16.msra.mxu0 0
    %390 = vmatprep.subr.bf16.mxu0 0
    %391 = vmatpush1.bf16.msra.mxu0 0
    %392 = vmatprep.subr.bf16.mxu0 0
    %393 = vmatpush1.bf16.msra.mxu0 0
    %394 = vmatprep.subr.bf16.mxu0 0
    %395 = vmatpush1.bf16.msra.mxu0 0
    %396 = vmatprep.subr.bf16.mxu0 0
    %397 = vmatpush1.bf16.msra.mxu0 0
    %398 = vmatprep.subr.bf16.mxu0 0
    %399 = vmatpush1.bf16.msra.mxu0 0
    %400 = vmatprep.subr.bf16.mxu0 0
    %401 = vmatpush1.bf16.msra.mxu0 0
    %402 = vmatprep.subr.bf16.mxu0 0
    %403 = vmatpush1.bf16.msra.mxu0 0
    %404 = vmatprep.subr.bf16.mxu0 0
    %405 = vmatpush1.bf16.msra.mxu0 0
    %406 = vmatprep.subr.bf16.mxu0 0
    %407 = vmatpush1.bf16.msra.mxu0 0
    %408 = vmatprep.mubr.bf16.mxu0 0
    %409 = vmatmul.mubr.bf16.gmra.mrb[0].mxu0 %v374
    %v410 = vpop.f32.mrb[0].mxu0
    %v411 = vadd.f32 %v358, %v410
    %v412 = vpop.f32.mrb[0].mxu0
    %v413 = vpop.f32.mrb[0].mxu0
    %v414 = vpop.f32.mrb[0].mxu0
    %415 = vdwg.mxu0
    %s416 = scalar_lea.vmem [#allocation10], 16
    %v417 = vld [vmem:[%s416] sm:$0xf]
    %v418 = vld [vmem:[%s416 + $0x4] sm:$0xf]
    %v419 = vld [vmem:[%s416 + $0x8] sm:$0xf]
    %v420 = vld [vmem:[%s416 + $0xc] sm:$0xf]
    %s421 = scalar_lea.vmem [#allocation13], 1
    %v422 = vld [vmem:[%s421] sm:$0x1]
    %v424 = vlaneseq
    %v425 = vshrl.u32 %v424, 7
    %v426 = vsub.s32 0, %v425
    %v427 = vrot.slane %v422, %v426
    %v433 = vunpack.c.l.b16 %v417
    %v434 = vunpack.c.l.b16 %v418
    %v435 = vunpack.c.l.b16 %v419
    %v436 = vunpack.c.l.b16 %v420
    %v437 = vpack.c.b16 %v434, %v433
    %v438 = vpack.c.b16 %v436, %v435
    %441 = vmatprep.subr.bf16.mxu0 0
    %442 = vmatpush1.bf16.msra.mxu0 %v437
    %443 = vmatprep.subr.bf16.mxu0 0
    %444 = vmatpush1.bf16.msra.mxu0 %v438
    %445 = vmatprep.subr.bf16.mxu0 0
    %446 = vmatpush1.bf16.msra.mxu0 0
    %447 = vmatprep.subr.bf16.mxu0 0
    %448 = vmatpush1.bf16.msra.mxu0 0
    %449 = vmatprep.subr.bf16.mxu0 0
    %450 = vmatpush1.bf16.msra.mxu0 0
    %451 = vmatprep.subr.bf16.mxu0 0
    %452 = vmatpush1.bf16.msra.mxu0 0
    %453 = vmatprep.subr.bf16.mxu0 0
    %454 = vmatpush1.bf16.msra.mxu0 0
    %455 = vmatprep.subr.bf16.mxu0 0
    %456 = vmatpush1.bf16.msra.mxu0 0
    %457 = vmatprep.subr.bf16.mxu0 0
    %458 = vmatpush1.bf16.msra.mxu0 0
    %459 = vmatprep.subr.bf16.mxu0 0
    %460 = vmatpush1.bf16.msra.mxu0 0
    %461 = vmatprep.subr.bf16.mxu0 0
    %462 = vmatpush1.bf16.msra.mxu0 0
    %463 = vmatprep.subr.bf16.mxu0 0
    %464 = vmatpush1.bf16.msra.mxu0 0
    %465 = vmatprep.subr.bf16.mxu0 0
    %466 = vmatpush1.bf16.msra.mxu0 0
    %467 = vmatprep.subr.bf16.mxu0 0
    %468 = vmatpush1.bf16.msra.mxu0 0
    %469 = vmatprep.subr.bf16.mxu0 0
    %470 = vmatpush1.bf16.msra.mxu0 0
    %471 = vmatprep.subr.bf16.mxu0 0
    %472 = vmatpush1.bf16.msra.mxu0 0
    %473 = vmatprep.mubr.bf16.mxu0 0
    %474 = vmatmul.mubr.bf16.gmra.mrb[0].mxu0 %v374
    %v475 = vpop.f32.mrb[0].mxu0
    %v476 = vadd.f32 %v427, %v475
    %v477 = vpop.f32.mrb[0].mxu0
    %v478 = vpop.f32.mrb[0].mxu0
    %v479 = vpop.f32.mrb[0].mxu0
    %480 = vdwg.mxu0
    %s481 = scalar_lea.vmem [#allocation10], 32
    %v482 = vld [vmem:[%s481] sm:$0xf]
    %v483 = vld [vmem:[%s481 + $0x4] sm:$0xf]
    %v484 = vld [vmem:[%s481 + $0x8] sm:$0xf]
    %v485 = vld [vmem:[%s481 + $0xc] sm:$0xf]
    %s486 = scalar_lea.vmem [#allocation13], 2
    %v487 = vld [vmem:[%s486] sm:$0x1]
    %v489 = vlaneseq
    %v490 = vshrl.u32 %v489, 7
    %v491 = vsub.s32 0, %v490
    %v492 = vrot.slane %v487, %v491
    %v498 = vunpack.c.l.b16 %v482
    %v499 = vunpack.c.l.b16 %v483
    %v500 = vunpack.c.l.b16 %v484
    %v501 = vunpack.c.l.b16 %v485
    %v502 = vpack.c.b16 %v499, %v498
    %v503 = vpack.c.b16 %v501, %v500
    %506 = vmatprep.subr.bf16.mxu0 0
    %507 = vmatpush1.bf16.msra.mxu0 %v502
    %508 = vmatprep.subr.bf16.mxu0 0
    %509 = vmatpush1.bf16.msra.mxu0 %v503
    %510 = vmatprep.subr.bf16.mxu0 0
    %511 = vmatpush1.bf16.msra.mxu0 0
    %512 = vmatprep.subr.bf16.mxu0 0
    %513 = vmatpush1.bf16.msra.mxu0 0
    %514 = vmatprep.subr.bf16.mxu0 0
    %515 = vmatpush1.bf16.msra.mxu0 0
    %516 = vmatprep.subr.bf16.mxu0 0
    %517 = vmatpush1.bf16.msra.mxu0 0
    %518 = vmatprep.subr.bf16.mxu0 0
    %519 = vmatpush1.bf16.msra.mxu0 0
    %520 = vmatprep.subr.bf16.mxu0 0
    %521 = vmatpush1.bf16.msra.mxu0 0
    %522 = vmatprep.subr.bf16.mxu0 0
    %523 = vmatpush1.bf16.msra.mxu0 0
    %524 = vmatprep.subr.bf16.mxu0 0
    %525 = vmatpush1.bf16.msra.mxu0 0
    %526 = vmatprep.subr.bf16.mxu0 0
    %527 = vmatpush1.bf16.msra.mxu0 0
    %528 = vmatprep.subr.bf16.mxu0 0
    %529 = vmatpush1.bf16.msra.mxu0 0
    %530 = vmatprep.subr.bf16.mxu0 0
    %531 = vmatpush1.bf16.msra.mxu0 0
    %532 = vmatprep.subr.bf16.mxu0 0
    %533 = vmatpush1.bf16.msra.mxu0 0
    %534 = vmatprep.subr.bf16.mxu0 0
    %535 = vmatpush1.bf16.msra.mxu0 0
    %536 = vmatprep.subr.bf16.mxu0 0
    %537 = vmatpush1.bf16.msra.mxu0 0
    %538 = vmatprep.mubr.bf16.mxu0 0
    %539 = vmatmul.mubr.bf16.gmra.mrb[0].mxu0 %v374
    %v540 = vpop.f32.mrb[0].mxu0
    %v541 = vadd.f32 %v492, %v540
    %v542 = vpop.f32.mrb[0].mxu0
    %v543 = vpop.f32.mrb[0].mxu0
    %v544 = vpop.f32.mrb[0].mxu0
    %545 = vdwg.mxu0
    %v546 = vadd.f32 %v229, %v411
    %v547 = vxor.u32 %v546, 2147483648
    %v548 = vmul.f32 %v547, 1.442695
    %v549 = vpow.pop %v548
    %v550 = vadd.f32 %v549, 1.0
    %v551 = vrcp.pop %v550
    %v552 = vmul.f32 1.0, %v551
    %v553 = vadd.f32 %v286, %v476
    %v554 = vxor.u32 %v553, 2147483648
    %v555 = vmul.f32 %v554, 1.442695
    %v556 = vpow.pop %v555
    %v557 = vadd.f32 %v556, 1.0
    %v558 = vrcp.pop %v557
    %v559 = vmul.f32 1.0, %v558
    %v560 = vmul.f32 %v552, %v541
    %v561 = vadd.f32 %v343, %v560
    %v562 = vtanh.pop %v561
    %v563 = vsub.f32 1.0, %v559
    %v564 = vmul.f32 %v563, %v562
    %v565 = vmul.f32 %v559, %v165
    %v566 = vadd.f32 %v564, %v565
    %v568 = vcombine.high %v566, %v566
    %v570 = vunpack.c.l.s4 1966171168
    %v571 = vunpack.c.0.s8 %v570
    %v572 = vlaneseq
    %v573 = vshrl.u32 %v572, 7
    %v574 = vsub.s32 %v571, %v573
    %v575 = vrot.slane %v566, %v574
    %v577 = vunpack.c.l.s4 1966171168
    %v578 = vunpack.c.0.s8 %v577
    %v579 = vlaneseq
    %v580 = vshrl.u32 %v579, 7
    %v581 = vsub.s32 %v578, %v580
    %v582 = vrot.slane %v568, %v581
    %v583 = vcombine.high %v575, %v575
    %v584 = vcombine.high %v582, %v582
    %v586 = vunpack.c.l.s4 1966171168
    %v587 = vunpack.c.0.s8 %v586
    %v588 = vlaneseq
    %v589 = vshrl.u32 %v588, 7
    %v590 = vsub.s32 %v587, %v589
    %v591 = vrot.slane %v575, %v590
    %v593 = vunpack.c.l.s4 1966171168
    %v594 = vunpack.c.0.s8 %v593
    %v595 = vlaneseq
    %v596 = vshrl.u32 %v595, 7
    %v597 = vsub.s32 %v594, %v596
    %v598 = vrot.slane %v582, %v597
    %v600 = vunpack.c.l.s4 1966171168
    %v601 = vunpack.c.0.s8 %v600
    %v602 = vlaneseq
    %v603 = vshrl.u32 %v602, 7
    %v604 = vsub.s32 %v601, %v603
    %v605 = vrot.slane %v583, %v604
    %v607 = vunpack.c.l.s4 1966171168
    %v608 = vunpack.c.0.s8 %v607
    %v609 = vlaneseq
    %v610 = vshrl.u32 %v609, 7
    %v611 = vsub.s32 %v608, %v610
    %v612 = vrot.slane %v584, %v611
    %v613 = vcombine.high %v591, %v591
    %v614 = vcombine.high %v598, %v598
    %v615 = vcombine.high %v605, %v605
    %v616 = vcombine.high %v612, %v612
    %v617 = vunpack.c.l.bf16 %v166
    %v618 = vunpack.c.l.bf16 %v167
    %v619 = vunpack.c.l.bf16 %v168
    %v620 = vunpack.c.l.bf16 %v169
    %v621 = vunpack.c.l.bf16 %v170
    %v622 = vunpack.c.l.bf16 %v171
    %v623 = vunpack.c.l.bf16 %v172
    %v624 = vunpack.c.l.bf16 %v173
    %v625 = vlaneseq
    %v626 = vshrl.u32 %v625, 7
    %v627 = vsub.s32 0, %v626
    %v628 = vrot.slane %v591, %v627
    %v629 = vlaneseq
    %v630 = vshrl.u32 %v629, 7
    %v631 = vsub.s32 0, %v630
    %v632 = vrot.slane %v605, %v631
    %v633 = vlaneseq
    %v634 = vshrl.u32 %v633, 7
    %v635 = vsub.s32 0, %v634
    %v636 = vrot.slane %v613, %v635
    %v637 = vlaneseq
    %v638 = vshrl.u32 %v637, 7
    %v639 = vsub.s32 0, %v638
    %v640 = vrot.slane %v615, %v639
    %v641 = vlaneseq
    %v642 = vshrl.u32 %v641, 7
    %v643 = vsub.s32 0, %v642
    %v644 = vrot.slane %v598, %v643
    %v645 = vlaneseq
    %v646 = vshrl.u32 %v645, 7
    %v647 = vsub.s32 0, %v646
    %v648 = vrot.slane %v612, %v647
    %v649 = vlaneseq
    %v650 = vshrl.u32 %v649, 7
    %v651 = vsub.s32 0, %v650
    %v652 = vrot.slane %v614, %v651
    %v653 = vlaneseq
    %v654 = vshrl.u32 %v653, 7
    %v655 = vsub.s32 0, %v654
    %v656 = vrot.slane %v616, %v655
    %v665 = vmul.f32 %v628, %v617
    %v666 = vmul.f32 %v632, %v618
    %v667 = vmul.f32 %v636, %v619
    %v668 = vmul.f32 %v640, %v620
    %v669 = vmul.f32 %v644, %v621
    %v670 = vmul.f32 %v648, %v622
    %v671 = vmul.f32 %v652, %v623
    %v672 = vmul.f32 %v656, %v624
    %v673 = vsel %vm372, %v665, 0.0
    %674 = vadd.xlane.f32.xlu0 %v673
    %v675 = vpop.xlane.xlu0 %674
    %v676 = vsel %vm372, %v666, 0.0
    %677 = vadd.xlane.f32.xlu0 %v676
    %v678 = vpop.xlane.xlu0 %677
    %v679 = vsel %vm372, %v667, 0.0
    %680 = vadd.xlane.f32.xlu0 %v679
    %v681 = vpop.xlane.xlu0 %680
    %v682 = vsel %vm372, %v668, 0.0
    %683 = vadd.xlane.f32.xlu0 %v682
    %v684 = vpop.xlane.xlu0 %683
    %v685 = vsel %vm372, %v669, 0.0
    %686 = vadd.xlane.f32.xlu0 %v685
    %v687 = vpop.xlane.xlu0 %686
    %v688 = vsel %vm372, %v670, 0.0
    %689 = vadd.xlane.f32.xlu0 %v688
    %v690 = vpop.xlane.xlu0 %689
    %v691 = vsel %vm372, %v671, 0.0
    %692 = vadd.xlane.f32.xlu0 %v691
    %v693 = vpop.xlane.xlu0 %692
    %v694 = vsel %vm372, %v672, 0.0
    %695 = vadd.xlane.f32.xlu0 %v694
    %v696 = vpop.xlane.xlu0 %695
    %v705 = vlaneseq
    %v706 = vand.u32 %v705, 127
    %v707 = vlaneseq
    %v708 = vshrl.u32 %v707, 7
    %v709 = vsub.s32 %v706, %v708
    %v710 = vrot.slane %v675, %v709
    %v711 = vlaneseq
    %v712 = vshrl.u32 %v711, 7
    %v713 = vsub.s32 %v706, %v712
    %v714 = vrot.slane %v678, %v713
    %v715 = vlaneseq
    %v716 = vshrl.u32 %v715, 7
    %v717 = vsub.s32 %v706, %v716
    %v718 = vrot.slane %v681, %v717
    %v719 = vlaneseq
    %v720 = vshrl.u32 %v719, 7
    %v721 = vsub.s32 %v706, %v720
    %v722 = vrot.slane %v684, %v721
    %v723 = vlaneseq
    %v724 = vshrl.u32 %v723, 7
    %v725 = vsub.s32 %v706, %v724
    %v726 = vrot.slane %v687, %v725
    %v727 = vlaneseq
    %v728 = vshrl.u32 %v727, 7
    %v729 = vsub.s32 %v706, %v728
    %v730 = vrot.slane %v690, %v729
    %v731 = vlaneseq
    %v732 = vshrl.u32 %v731, 7
    %v733 = vsub.s32 %v706, %v732
    %v734 = vrot.slane %v693, %v733
    %v735 = vlaneseq
    %v736 = vshrl.u32 %v735, 7
    %v737 = vsub.s32 %v706, %v736
    %v738 = vrot.slane %v696, %v737
    %vm739 = vcmask 1041409
    %v740 = vsel %vm739, %v714, %v710
    %vm741 = vcmask 1042434
    %v742 = vsel %vm741, %v718, %v740
    %vm743 = vcmask 1043459
    %v744 = vsel %vm743, %v722, %v742
    %vm745 = vcmask 1044484
    %v746 = vsel %vm745, %v726, %v744
    %vm747 = vcmask 1045509
    %v748 = vsel %vm747, %v730, %v746
    %vm749 = vcmask 1046534
    %v750 = vsel %vm749, %v734, %v748
    %vm751 = vcmask 1047559
    %v752 = vsel %vm751, %v738, %v750
    %vm754 = vcmask 64512
    %v755 = vsel %vm754, %v752, -inf
    %756 = vmax.xlane.f32.xlu0 %v755
    %v757 = vpop.xlane.xlu0 %756
    %v759 = vlaneseq
    %v760 = vshrl.u32 %v759, 7
    %v761 = vsub.s32 0, %v760
    %v762 = vrot.slane %v757, %v761
    %v763 = vlaneseq
    %v764 = vshrl.u32 %v763, 7
    %v765 = vsub.s32 1, %v764
    %v766 = vrot.slane %v757, %v765
    %v767 = vlaneseq
    %v768 = vshrl.u32 %v767, 7
    %v769 = vsub.s32 2, %v768
    %v770 = vrot.slane %v757, %v769
    %v771 = vlaneseq
    %v772 = vshrl.u32 %v771, 7
    %v773 = vsub.s32 3, %v772
    %v774 = vrot.slane %v757, %v773
    %v775 = vlaneseq
    %v776 = vshrl.u32 %v775, 7
    %v777 = vsub.s32 4, %v776
    %v778 = vrot.slane %v757, %v777
    %v779 = vlaneseq
    %v780 = vshrl.u32 %v779, 7
    %v781 = vsub.s32 5, %v780
    %v782 = vrot.slane %v757, %v781
    %v783 = vlaneseq
    %v784 = vshrl.u32 %v783, 7
    %v785 = vsub.s32 6, %v784
    %v786 = vrot.slane %v757, %v785
    %v787 = vlaneseq
    %v788 = vshrl.u32 %v787, 7
    %v789 = vsub.s32 7, %v788
    %v790 = vrot.slane %v757, %v789
    %v799 = vsub.f32 %v675, %v762
    %v800 = vsub.f32 %v678, %v766
    %v801 = vsub.f32 %v681, %v770
    %v802 = vsub.f32 %v684, %v774
    %v803 = vsub.f32 %v687, %v778
    %v804 = vsub.f32 %v690, %v782
    %v805 = vsub.f32 %v693, %v786
    %v806 = vsub.f32 %v696, %v790
    %v807 = vmul.f32 %v799, 1.442695
    %v808 = vpow.pop %v807
    %v809 = vmul.f32 %v800, 1.442695
    %v810 = vpow.pop %v809
    %v811 = vmul.f32 %v801, 1.442695
    %v812 = vpow.pop %v811
    %v813 = vmul.f32 %v802, 1.442695
    %v814 = vpow.pop %v813
    %v815 = vmul.f32 %v803, 1.442695
    %v816 = vpow.pop %v815
    %v817 = vmul.f32 %v804, 1.442695
    %v818 = vpow.pop %v817
    %v819 = vmul.f32 %v805, 1.442695
    %v820 = vpow.pop %v819
    %v821 = vmul.f32 %v806, 1.442695
    %v822 = vpow.pop %v821
    %831 = vset.pattern.permute.xlu0 0
    %832 = vperm.xlu0 %831, %v808
    %v833 = vpop.permute.xlu0 %832
    %834 = vset.pattern.permute.xlu0 0
    %835 = vperm.xlu0 %834, %v810
    %v836 = vpop.permute.xlu0 %835
    %837 = vset.pattern.permute.xlu0 0
    %838 = vperm.xlu0 %837, %v812
    %v839 = vpop.permute.xlu0 %838
    %840 = vset.pattern.permute.xlu0 0
    %841 = vperm.xlu0 %840, %v814
    %v842 = vpop.permute.xlu0 %841
    %843 = vset.pattern.permute.xlu0 0
    %844 = vperm.xlu0 %843, %v816
    %v845 = vpop.permute.xlu0 %844
    %846 = vset.pattern.permute.xlu0 0
    %847 = vperm.xlu0 %846, %v818
    %v848 = vpop.permute.xlu0 %847
    %849 = vset.pattern.permute.xlu0 0
    %850 = vperm.xlu0 %849, %v820
    %v851 = vpop.permute.xlu0 %850
    %852 = vset.pattern.permute.xlu0 0
    %853 = vperm.xlu0 %852, %v822
    %v854 = vpop.permute.xlu0 %853
    %v855 = vlaneseq
    %v856 = vshrl.u32 %v855, 7
    %v857 = vsub.s32 %v706, %v856
    %v858 = vrot.slane %v833, %v857
    %v859 = vlaneseq
    %v860 = vshrl.u32 %v859, 7
    %v861 = vsub.s32 %v706, %v860
    %v862 = vrot.slane %v836, %v861
    %v863 = vlaneseq
    %v864 = vshrl.u32 %v863, 7
    %v865 = vsub.s32 %v706, %v864
    %v866 = vrot.slane %v839, %v865
    %v867 = vlaneseq
    %v868 = vshrl.u32 %v867, 7
    %v869 = vsub.s32 %v706, %v868
    %v870 = vrot.slane %v842, %v869
    %v871 = vlaneseq
    %v872 = vshrl.u32 %v871, 7
    %v873 = vsub.s32 %v706, %v872
    %v874 = vrot.slane %v845, %v873
    %v875 = vlaneseq
    %v876 = vshrl.u32 %v875, 7
    %v877 = vsub.s32 %v706, %v876
    %v878 = vrot.slane %v848, %v877
    %v879 = vlaneseq
    %v880 = vshrl.u32 %v879, 7
    %v881 = vsub.s32 %v706, %v880
    %v882 = vrot.slane %v851, %v881
    %v883 = vlaneseq
    %v884 = vshrl.u32 %v883, 7
    %v885 = vsub.s32 %v706, %v884
    %v886 = vrot.slane %v854, %v885
    %v887 = vsel %vm739, %v862, %v858
    %v888 = vsel %vm741, %v866, %v887
    %v889 = vsel %vm743, %v870, %v888
    %v890 = vsel %vm745, %v874, %v889
    %v891 = vsel %vm747, %v878, %v890
    %v892 = vsel %vm749, %v882, %v891
    %v893 = vsel %vm751, %v886, %v892
    %v895 = vsel %vm754, %v893, 0.0
    %896 = vadd.xlane.f32.xlu0 %v895
    %v897 = vpop.xlane.xlu0 %896
    %v899 = vlaneseq
    %v900 = vshrl.u32 %v899, 7
    %v901 = vsub.s32 0, %v900
    %v902 = vrot.slane %v897, %v901
    %v903 = vlaneseq
    %v904 = vshrl.u32 %v903, 7
    %v905 = vsub.s32 1, %v904
    %v906 = vrot.slane %v897, %v905
    %v907 = vlaneseq
    %v908 = vshrl.u32 %v907, 7
    %v909 = vsub.s32 2, %v908
    %v910 = vrot.slane %v897, %v909
    %v911 = vlaneseq
    %v912 = vshrl.u32 %v911, 7
    %v913 = vsub.s32 3, %v912
    %v914 = vrot.slane %v897, %v913
    %v915 = vlaneseq
    %v916 = vshrl.u32 %v915, 7
    %v917 = vsub.s32 4, %v916
    %v918 = vrot.slane %v897, %v917
    %v919 = vlaneseq
    %v920 = vshrl.u32 %v919, 7
    %v921 = vsub.s32 5, %v920
    %v922 = vrot.slane %v897, %v921
    %v923 = vlaneseq
    %v924 = vshrl.u32 %v923, 7
    %v925 = vsub.s32 6, %v924
    %v926 = vrot.slane %v897, %v925
    %v927 = vlaneseq
    %v928 = vshrl.u32 %v927, 7
    %v929 = vsub.s32 7, %v928
    %v930 = vrot.slane %v897, %v929
    %v939 = vrcp.pop %v902
    %v940 = vmul.f32 %v808, %v939
    %v941 = vrcp.pop %v906
    %v942 = vmul.f32 %v810, %v941
    %v943 = vrcp.pop %v910
    %v944 = vmul.f32 %v812, %v943
    %v945 = vrcp.pop %v914
    %v946 = vmul.f32 %v814, %v945
    %v947 = vrcp.pop %v918
    %v948 = vmul.f32 %v816, %v947
    %v949 = vrcp.pop %v922
    %v950 = vmul.f32 %v818, %v949
    %v951 = vrcp.pop %v926
    %v952 = vmul.f32 %v820, %v951
    %v953 = vrcp.pop %v930
    %v954 = vmul.f32 %v822, %v953
    %956 = vset.pattern.permute.xlu0 0
    %957 = vperm.xlu0 %956, %v940
    %v958 = vpop.permute.xlu0 %957
    %961 = vset.pattern.permute.xlu0 0
    %962 = vperm.xlu0 %961, %v942
    %v963 = vpop.permute.xlu0 %962
    %966 = vset.pattern.permute.xlu0 0
    %967 = vperm.xlu0 %966, %v944
    %v968 = vpop.permute.xlu0 %967
    %971 = vset.pattern.permute.xlu0 0
    %972 = vperm.xlu0 %971, %v946
    %v973 = vpop.permute.xlu0 %972
    %976 = vset.pattern.permute.xlu0 0
    %977 = vperm.xlu0 %976, %v948
    %v978 = vpop.permute.xlu0 %977
    %981 = vset.pattern.permute.xlu0 0
    %982 = vperm.xlu0 %981, %v950
    %v983 = vpop.permute.xlu0 %982
    %986 = vset.pattern.permute.xlu0 0
    %987 = vperm.xlu0 %986, %v952
    %v988 = vpop.permute.xlu0 %987
    %991 = vset.pattern.permute.xlu0 0
    %992 = vperm.xlu0 %991, %v954
    %v993 = vpop.permute.xlu0 %992
    %v995 = vmul.f32 %v958, %v617
    %v996 = vmul.f32 %v963, %v618
    %v997 = vmul.f32 %v968, %v619
    %v998 = vmul.f32 %v973, %v620
    %v999 = vmul.f32 %v978, %v621
    %v1000 = vmul.f32 %v983, %v622
    %v1001 = vmul.f32 %v988, %v623
    %v1002 = vmul.f32 %v993, %v624
    %v1003 = vsel %vm372, %v995, 0.0
    %v1004 = vrot.slane %v1003, 4
    %v1005 = vadd.f32 %v1003, %v1004
    %v1006 = vrot.slane %v1005, 2
    %v1007 = vadd.f32 %v1005, %v1006
    %v1008 = vrot.slane %v1007, 1
    %v1009 = vadd.f32 %v1007, %v1008
    %v1010 = vsel %vm372, %v996, 0.0
    %v1011 = vrot.slane %v1010, 4
    %v1012 = vadd.f32 %v1010, %v1011
    %v1013 = vrot.slane %v1012, 2
    %v1014 = vadd.f32 %v1012, %v1013
    %v1015 = vrot.slane %v1014, 1
    %v1016 = vadd.f32 %v1014, %v1015
    %v1017 = vsel %vm372, %v997, 0.0
    %v1018 = vrot.slane %v1017, 4
    %v1019 = vadd.f32 %v1017, %v1018
    %v1020 = vrot.slane %v1019, 2
    %v1021 = vadd.f32 %v1019, %v1020
    %v1022 = vrot.slane %v1021, 1
    %v1023 = vadd.f32 %v1021, %v1022
    %v1024 = vsel %vm372, %v998, 0.0
    %v1025 = vrot.slane %v1024, 4
    %v1026 = vadd.f32 %v1024, %v1025
    %v1027 = vrot.slane %v1026, 2
    %v1028 = vadd.f32 %v1026, %v1027
    %v1029 = vrot.slane %v1028, 1
    %v1030 = vadd.f32 %v1028, %v1029
    %v1031 = vsel %vm372, %v999, 0.0
    %v1032 = vrot.slane %v1031, 4
    %v1033 = vadd.f32 %v1031, %v1032
    %v1034 = vrot.slane %v1033, 2
    %v1035 = vadd.f32 %v1033, %v1034
    %v1036 = vrot.slane %v1035, 1
    %v1037 = vadd.f32 %v1035, %v1036
    %v1038 = vsel %vm372, %v1000, 0.0
    %v1039 = vrot.slane %v1038, 4
    %v1040 = vadd.f32 %v1038, %v1039
    %v1041 = vrot.slane %v1040, 2
    %v1042 = vadd.f32 %v1040, %v1041
    %v1043 = vrot.slane %v1042, 1
    %v1044 = vadd.f32 %v1042, %v1043
    %v1045 = vsel %vm372, %v1001, 0.0
    %v1046 = vrot.slane %v1045, 4
    %v1047 = vadd.f32 %v1045, %v1046
    %v1048 = vrot.slane %v1047, 2
    %v1049 = vadd.f32 %v1047, %v1048
    %v1050 = vrot.slane %v1049, 1
    %v1051 = vadd.f32 %v1049, %v1050
    %v1052 = vsel %vm372, %v1002, 0.0
    %v1053 = vrot.slane %v1052, 4
    %v1054 = vadd.f32 %v1052, %v1053
    %v1055 = vrot.slane %v1054, 2
    %v1056 = vadd.f32 %v1054, %v1055
    %v1057 = vrot.slane %v1056, 1
    %v1058 = vadd.f32 %v1056, %v1057
    %v1059 = vld [vmem:[%s7] sm:$0xf]
    %v1060 = vld [vmem:[%s7 + $0x4] sm:$0xf]
    %v1061 = vld [vmem:[#allocation14] sm:$0xf]
    %v1062 = vld [vmem:[#allocation14 + $0x4] sm:$0xf]
    %v1063 = vld [vmem:[#allocation14 + $0x8] sm:$0xf]
    %v1064 = vld [vmem:[#allocation14 + $0xc] sm:$0xf]
    %v1065 = vpack.c.bf16 %v1009, %v1009
    %v1066 = vpack.c.bf16 %v1016, %v1016
    %v1067 = vpack.c.bf16 %v1023, %v1023
    %v1068 = vpack.c.bf16 %v1030, %v1030
    %v1069 = vpack.c.bf16 %v1037, %v1037
    %v1070 = vpack.c.bf16 %v1044, %v1044
    %v1071 = vpack.c.bf16 %v1051, %v1051
    %v1072 = vpack.c.bf16 %v1058, %v1058
    %v1081 = vunpack.c.l.b16 %v1065
    %v1082 = vunpack.c.l.b16 %v1066
    %v1083 = vunpack.c.l.b16 %v1067
    %v1084 = vunpack.c.l.b16 %v1068
    %v1085 = vunpack.c.l.b16 %v1069
    %v1086 = vunpack.c.l.b16 %v1070
    %v1087 = vunpack.c.l.b16 %v1071
    %v1088 = vunpack.c.l.b16 %v1072
    %v1089 = vsel %vm739, %v1082, %v1081
    %v1090 = vsel %vm741, %v1083, %v1089
    %v1091 = vsel %vm743, %v1084, %v1090
    %v1092 = vsel %vm745, %v1085, %v1091
    %v1093 = vsel %vm747, %v1086, %v1092
    %v1094 = vsel %vm749, %v1087, %v1093
    %v1095 = vsel %vm751, %v1088, %v1094
    %v1096 = vpack.c.b16 %v1095, %v1095
    %v1101 = vunpack.c.l.b16 %v1061
    %v1102 = vunpack.c.l.b16 %v1062
    %v1103 = vunpack.c.l.b16 %v1063
    %v1104 = vunpack.c.l.b16 %v1064
    %v1105 = vpack.c.b16 %v1102, %v1101
    %v1106 = vpack.c.b16 %v1104, %v1103
    %v1110 = vsel %vm372, %v1096, 0
    %1112 = vmatprep.subr.bf16.mxu0 0
    %1113 = vmatpush1.bf16.msra.mxu0 %v1105
    %1114 = vmatprep.subr.bf16.mxu0 0
    %1115 = vmatpush1.bf16.msra.mxu0 %v1106
    %1116 = vmatprep.subr.bf16.mxu0 0
    %1117 = vmatpush1.bf16.msra.mxu0 0
    %1118 = vmatprep.subr.bf16.mxu0 0
    %1119 = vmatpush1.bf16.msra.mxu0 0
    %1120 = vmatprep.subr.bf16.mxu0 0
    %1121 = vmatpush1.bf16.msra.mxu0 0
    %1122 = vmatprep.subr.bf16.mxu0 0
    %1123 = vmatpush1.bf16.msra.mxu0 0
    %1124 = vmatprep.subr.bf16.mxu0 0
    %1125 = vmatpush1.bf16.msra.mxu0 0
    %1126 = vmatprep.subr.bf16.mxu0 0
    %1127 = vmatpush1.bf16.msra.mxu0 0
    %1128 = vmatprep.subr.bf16.mxu0 0
    %1129 = vmatpush1.bf16.msra.mxu0 0
    %1130 = vmatprep.subr.bf16.mxu0 0
    %1131 = vmatpush1.bf16.msra.mxu0 0
    %1132 = vmatprep.subr.bf16.mxu0 0
    %1133 = vmatpush1.bf16.msra.mxu0 0
    %1134 = vmatprep.subr.bf16.mxu0 0
    %1135 = vmatpush1.bf16.msra.mxu0 0
    %1136 = vmatprep.subr.bf16.mxu0 0
    %1137 = vmatpush1.bf16.msra.mxu0 0
    %1138 = vmatprep.subr.bf16.mxu0 0
    %1139 = vmatpush1.bf16.msra.mxu0 0
    %1140 = vmatprep.subr.bf16.mxu0 0
    %1141 = vmatpush1.bf16.msra.mxu0 0
    %1142 = vmatprep.subr.bf16.mxu0 0
    %1143 = vmatpush1.bf16.msra.mxu0 0
    %1144 = vmatprep.mubr.bf16.mxu0 0
    %1145 = vmatmul.mubr.bf16.gmra.mrb[0].mxu0 %v1110
    %v1146 = vpop.f32.mrb[0].mxu0
    %v1147 = vadd.f32 0.0, %v1146
    %v1148 = vpop.f32.mrb[0].mxu0
    %v1149 = vpop.f32.mrb[0].mxu0
    %v1150 = vpop.f32.mrb[0].mxu0
    %1151 = vdwg.mxu0
    %v1154 = vunpack.c.l.b16 %v1059
    %v1155 = vunpack.c.l.b16 %v1060
    %v1156 = vpack.c.b16 %v1155, %v1154
    %1158 = vmatprep.subr.bf16.mxu0 0
    %1159 = vmatpush1.bf16.msra.mxu0 %v1156
    %1160 = vmatprep.subr.bf16.mxu0 0
    %1161 = vmatpush1.bf16.msra.mxu0 0
    %1162 = vmatprep.subr.bf16.mxu0 0
    %1163 = vmatpush1.bf16.msra.mxu0 0
    %1164 = vmatprep.subr.bf16.mxu0 0
    %1165 = vmatpush1.bf16.msra.mxu0 0
    %1166 = vmatprep.subr.bf16.mxu0 0
    %1167 = vmatpush1.bf16.msra.mxu0 0
    %1168 = vmatprep.subr.bf16.mxu0 0
    %1169 = vmatpush1.bf16.msra.mxu0 0
    %1170 = vmatprep.subr.bf16.mxu0 0
    %1171 = vmatpush1.bf16.msra.mxu0 0
    %1172 = vmatprep.subr.bf16.mxu0 0
    %1173 = vmatpush1.bf16.msra.mxu0 0
    %1174 = vmatprep.subr.bf16.mxu0 0
    %1175 = vmatpush1.bf16.msra.mxu0 0
    %1176 = vmatprep.subr.bf16.mxu0 0
    %1177 = vmatpush1.bf16.msra.mxu0 0
    %1178 = vmatprep.subr.bf16.mxu0 0
    %1179 = vmatpush1.bf16.msra.mxu0 0
    %1180 = vmatprep.subr.bf16.mxu0 0
    %1181 = vmatpush1.bf16.msra.mxu0 0
    %1182 = vmatprep.subr.bf16.mxu0 0
    %1183 = vmatpush1.bf16.msra.mxu0 0
    %1184 = vmatprep.subr.bf16.mxu0 0
    %1185 = vmatpush1.bf16.msra.mxu0 0
    %1186 = vmatprep.subr.bf16.mxu0 0
    %1187 = vmatpush1.bf16.msra.mxu0 0
    %1188 = vmatprep.subr.bf16.mxu0 0
    %1189 = vmatpush1.bf16.msra.mxu0 0
    %1190 = vmatprep.mubr.bf16.mxu0 0
    %1191 = vmatmul.mubr.bf16.gmra.mrb[0].mxu0 %v192
    %v1192 = vpop.f32.mrb[0].mxu0
    %v1193 = vadd.f32 %v1147, %v1192
    %v1194 = vpop.f32.mrb[0].mxu0
    %v1195 = vpop.f32.mrb[0].mxu0
    %v1196 = vpop.f32.mrb[0].mxu0
    %1197 = vdwg.mxu0
    %v1198 = vld [vmem:[%s10] sm:$0x1]
    %v1200 = vlaneseq
    %v1201 = vshrl.u32 %v1200, 7
    %v1202 = vsub.s32 0, %v1201
    %v1203 = vrot.slane %v1198, %v1202
    %v1205 = vadd.f32 %v1193, %v1203
    %s1206 = scalar_lea.vmem %s7, 8
    %v1207 = vld [vmem:[%s1206] sm:$0xf]
    %v1208 = vld [vmem:[%s1206 + $0x4] sm:$0xf]
    %s1209 = scalar_lea.vmem [#allocation14], 16
    %v1210 = vld [vmem:[%s1209] sm:$0xf]
    %v1211 = vld [vmem:[%s1209 + $0x4] sm:$0xf]
    %v1212 = vld [vmem:[%s1209 + $0x8] sm:$0xf]
    %v1213 = vld [vmem:[%s1209 + $0xc] sm:$0xf]
    %v1218 = vunpack.c.l.b16 %v1210
    %v1219 = vunpack.c.l.b16 %v1211
    %v1220 = vunpack.c.l.b16 %v1212
    %v1221 = vunpack.c.l.b16 %v1213
    %v1222 = vpack.c.b16 %v1219, %v1218
    %v1223 = vpack.c.b16 %v1221, %v1220
    %1226 = vmatprep.subr.bf16.mxu0 0
    %1227 = vmatpush1.bf16.msra.mxu0 %v1222
    %1228 = vmatprep.subr.bf16.mxu0 0
    %1229 = vmatpush1.bf16.msra.mxu0 %v1223
    %1230 = vmatprep.subr.bf16.mxu0 0
    %1231 = vmatpush1.bf16.msra.mxu0 0
    %1232 = vmatprep.subr.bf16.mxu0 0
    %1233 = vmatpush1.bf16.msra.mxu0 0
    %1234 = vmatprep.subr.bf16.mxu0 0
    %1235 = vmatpush1.bf16.msra.mxu0 0
    %1236 = vmatprep.subr.bf16.mxu0 0
    %1237 = vmatpush1.bf16.msra.mxu0 0
    %1238 = vmatprep.subr.bf16.mxu0 0
    %1239 = vmatpush1.bf16.msra.mxu0 0
    %1240 = vmatprep.subr.bf16.mxu0 0
    %1241 = vmatpush1.bf16.msra.mxu0 0
    %1242 = vmatprep.subr.bf16.mxu0 0
    %1243 = vmatpush1.bf16.msra.mxu0 0
    %1244 = vmatprep.subr.bf16.mxu0 0
    %1245 = vmatpush1.bf16.msra.mxu0 0
    %1246 = vmatprep.subr.bf16.mxu0 0
    %1247 = vmatpush1.bf16.msra.mxu0 0
    %1248 = vmatprep.subr.bf16.mxu0 0
    %1249 = vmatpush1.bf16.msra.mxu0 0
    %1250 = vmatprep.subr.bf16.mxu0 0
    %1251 = vmatpush1.bf16.msra.mxu0 0
    %1252 = vmatprep.subr.bf16.mxu0 0
    %1253 = vmatpush1.bf16.msra.mxu0 0
    %1254 = vmatprep.subr.bf16.mxu0 0
    %1255 = vmatpush1.bf16.msra.mxu0 0
    %1256 = vmatprep.subr.bf16.mxu0 0
    %1257 = vmatpush1.bf16.msra.mxu0 0
    %1258 = vmatprep.mubr.bf16.mxu0 0
    %1259 = vmatmul.mubr.bf16.gmra.mrb[0].mxu0 %v1110
    %v1260 = vpop.f32.mrb[0].mxu0
    %v1261 = vadd.f32 0.0, %v1260
    %v1262 = vpop.f32.mrb[0].mxu0
    %v1263 = vpop.f32.mrb[0].mxu0
    %v1264 = vpop.f32.mrb[0].mxu0
    %1265 = vdwg.mxu0
    %v1268 = vunpack.c.l.b16 %v1207
    %v1269 = vunpack.c.l.b16 %v1208
    %v1270 = vpack.c.b16 %v1269, %v1268
    %1272 = vmatprep.subr.bf16.mxu0 0
    %1273 = vmatpush1.bf16.msra.mxu0 %v1270
    %1274 = vmatprep.subr.bf16.mxu0 0
    %1275 = vmatpush1.bf16.msra.mxu0 0
    %1276 = vmatprep.subr.bf16.mxu0 0
    %1277 = vmatpush1.bf16.msra.mxu0 0
    %1278 = vmatprep.subr.bf16.mxu0 0
    %1279 = vmatpush1.bf16.msra.mxu0 0
    %1280 = vmatprep.subr.bf16.mxu0 0
    %1281 = vmatpush1.bf16.msra.mxu0 0
    %1282 = vmatprep.subr.bf16.mxu0 0
    %1283 = vmatpush1.bf16.msra.mxu0 0
    %1284 = vmatprep.subr.bf16.mxu0 0
    %1285 = vmatpush1.bf16.msra.mxu0 0
    %1286 = vmatprep.subr.bf16.mxu0 0
    %1287 = vmatpush1.bf16.msra.mxu0 0
    %1288 = vmatprep.subr.bf16.mxu0 0
    %1289 = vmatpush1.bf16.msra.mxu0 0
    %1290 = vmatprep.subr.bf16.mxu0 0
    %1291 = vmatpush1.bf16.msra.mxu0 0
    %1292 = vmatprep.subr.bf16.mxu0 0
    %1293 = vmatpush1.bf16.msra.mxu0 0
    %1294 = vmatprep.subr.bf16.mxu0 0
    %1295 = vmatpush1.bf16.msra.mxu0 0
    %1296 = vmatprep.subr.bf16.mxu0 0
    %1297 = vmatpush1.bf16.msra.mxu0 0
    %1298 = vmatprep.subr.bf16.mxu0 0
    %1299 = vmatpush1.bf16.msra.mxu0 0
    %1300 = vmatprep.subr.bf16.mxu0 0
    %1301 = vmatpush1.bf16.msra.mxu0 0
    %1302 = vmatprep.subr.bf16.mxu0 0
    %1303 = vmatpush1.bf16.msra.mxu0 0
    %1304 = vmatprep.mubr.bf16.mxu0 0
    %1305 = vmatmul.mubr.bf16.gmra.mrb[0].mxu0 %v192
    %v1306 = vpop.f32.mrb[0].mxu0
    %v1307 = vadd.f32 %v1261, %v1306
    %v1308 = vpop.f32.mrb[0].mxu0
    %v1309 = vpop.f32.mrb[0].mxu0
    %v1310 = vpop.f32.mrb[0].mxu0
    %1311 = vdwg.mxu0
    %s1312 = scalar_lea.vmem %s10, 1
    %v1313 = vld [vmem:[%s1312] sm:$0x1]
    %v1315 = vlaneseq
    %v1316 = vshrl.u32 %v1315, 7
    %v1317 = vsub.s32 0, %v1316
    %v1318 = vrot.slane %v1313, %v1317
    %v1320 = vadd.f32 %v1307, %v1318
    %s1321 = scalar_lea.vmem %s7, 16
    %v1322 = vld [vmem:[%s1321] sm:$0xf]
    %v1323 = vld [vmem:[%s1321 + $0x4] sm:$0xf]
    %s1324 = scalar_lea.vmem [#allocation14], 32
    %v1325 = vld [vmem:[%s1324] sm:$0xf]
    %v1326 = vld [vmem:[%s1324 + $0x4] sm:$0xf]
    %v1327 = vld [vmem:[%s1324 + $0x8] sm:$0xf]
    %v1328 = vld [vmem:[%s1324 + $0xc] sm:$0xf]
    %v1333 = vunpack.c.l.b16 %v1325
    %v1334 = vunpack.c.l.b16 %v1326
    %v1335 = vunpack.c.l.b16 %v1327
    %v1336 = vunpack.c.l.b16 %v1328
    %v1337 = vpack.c.b16 %v1334, %v1333
    %v1338 = vpack.c.b16 %v1336, %v1335
    %1341 = vmatprep.subr.bf16.mxu0 0
    %1342 = vmatpush1.bf16.msra.mxu0 %v1337
    %1343 = vmatprep.subr.bf16.mxu0 0
    %1344 = vmatpush1.bf16.msra.mxu0 %v1338
    %1345 = vmatprep.subr.bf16.mxu0 0
    %1346 = vmatpush1.bf16.msra.mxu0 0
    %1347 = vmatprep.subr.bf16.mxu0 0
    %1348 = vmatpush1.bf16.msra.mxu0 0
    %1349 = vmatprep.subr.bf16.mxu0 0
    %1350 = vmatpush1.bf16.msra.mxu0 0
    %1351 = vmatprep.subr.bf16.mxu0 0
    %1352 = vmatpush1.bf16.msra.mxu0 0
    %1353 = vmatprep.subr.bf16.mxu0 0
    %1354 = vmatpush1.bf16.msra.mxu0 0
    %1355 = vmatprep.subr.bf16.mxu0 0
    %1356 = vmatpush1.bf16.msra.mxu0 0
    %1357 = vmatprep.subr.bf16.mxu0 0
    %1358 = vmatpush1.bf16.msra.mxu0 0
    %1359 = vmatprep.subr.bf16.mxu0 0
    %1360 = vmatpush1.bf16.msra.mxu0 0
    %1361 = vmatprep.subr.bf16.mxu0 0
    %1362 = vmatpush1.bf16.msra.mxu0 0
    %1363 = vmatprep.subr.bf16.mxu0 0
    %1364 = vmatpush1.bf16.msra.mxu0 0
    %1365 = vmatprep.subr.bf16.mxu0 0
    %1366 = vmatpush1.bf16.msra.mxu0 0
    %1367 = vmatprep.subr.bf16.mxu0 0
    %1368 = vmatpush1.bf16.msra.mxu0 0
    %1369 = vmatprep.subr.bf16.mxu0 0
    %1370 = vmatpush1.bf16.msra.mxu0 0
    %1371 = vmatprep.subr.bf16.mxu0 0
    %1372 = vmatpush1.bf16.msra.mxu0 0
    %1373 = vmatprep.mubr.bf16.mxu0 0
    %1374 = vmatmul.mubr.bf16.gmra.mrb[0].mxu0 %v1110
    %v1375 = vpop.f32.mrb[0].mxu0
    %v1376 = vadd.f32 0.0, %v1375
    %v1377 = vpop.f32.mrb[0].mxu0
    %v1378 = vpop.f32.mrb[0].mxu0
    %v1379 = vpop.f32.mrb[0].mxu0
    %1380 = vdwg.mxu0
    %v1383 = vunpack.c.l.b16 %v1322
    %v1384 = vunpack.c.l.b16 %v1323
    %v1385 = vpack.c.b16 %v1384, %v1383
    %1387 = vmatprep.subr.bf16.mxu0 0
    %1388 = vmatpush1.bf16.msra.mxu0 %v1385
    %1389 = vmatprep.subr.bf16.mxu0 0
    %1390 = vmatpush1.bf16.msra.mxu0 0
    %1391 = vmatprep.subr.bf16.mxu0 0
    %1392 = vmatpush1.bf16.msra.mxu0 0
    %1393 = vmatprep.subr.bf16.mxu0 0
    %1394 = vmatpush1.bf16.msra.mxu0 0
    %1395 = vmatprep.subr.bf16.mxu0 0
    %1396 = vmatpush1.bf16.msra.mxu0 0
    %1397 = vmatprep.subr.bf16.mxu0 0
    %1398 = vmatpush1.bf16.msra.mxu0 0
    %1399 = vmatprep.subr.bf16.mxu0 0
    %1400 = vmatpush1.bf16.msra.mxu0 0
    %1401 = vmatprep.subr.bf16.mxu0 0
    %1402 = vmatpush1.bf16.msra.mxu0 0
    %1403 = vmatprep.subr.bf16.mxu0 0
    %1404 = vmatpush1.bf16.msra.mxu0 0
    %1405 = vmatprep.subr.bf16.mxu0 0
    %1406 = vmatpush1.bf16.msra.mxu0 0
    %1407 = vmatprep.subr.bf16.mxu0 0
    %1408 = vmatpush1.bf16.msra.mxu0 0
    %1409 = vmatprep.subr.bf16.mxu0 0
    %1410 = vmatpush1.bf16.msra.mxu0 0
    %1411 = vmatprep.subr.bf16.mxu0 0
    %1412 = vmatpush1.bf16.msra.mxu0 0
    %1413 = vmatprep.subr.bf16.mxu0 0
    %1414 = vmatpush1.bf16.msra.mxu0 0
    %1415 = vmatprep.subr.bf16.mxu0 0
    %1416 = vmatpush1.bf16.msra.mxu0 0
    %1417 = vmatprep.subr.bf16.mxu0 0
    %1418 = vmatpush1.bf16.msra.mxu0 0
    %1419 = vmatprep.mubr.bf16.mxu0 0
    %1420 = vmatmul.mubr.bf16.gmra.mrb[0].mxu0 %v192
    %v1421 = vpop.f32.mrb[0].mxu0
    %v1422 = vadd.f32 %v1376, %v1421
    %v1423 = vpop.f32.mrb[0].mxu0
    %v1424 = vpop.f32.mrb[0].mxu0
    %v1425 = vpop.f32.mrb[0].mxu0
    %1426 = vdwg.mxu0
    %s1427 = scalar_lea.vmem %s10, 2
    %v1428 = vld [vmem:[%s1427] sm:$0x1]
    %v1430 = vlaneseq
    %v1431 = vshrl.u32 %v1430, 7
    %v1432 = vsub.s32 0, %v1431
    %v1433 = vrot.slane %v1428, %v1432
    %v1435 = vadd.f32 %v1422, %v1433
    %v1436 = vld [vmem:[#allocation16] sm:$0xf]
    %v1437 = vld [vmem:[#allocation16 + $0x4] sm:$0xf]
    %v1438 = vld [vmem:[#allocation16 + $0x8] sm:$0xf]
    %v1439 = vld [vmem:[#allocation16 + $0xc] sm:$0xf]
    %v1440 = vpack.c.bf16 %v566, %v566
    %v1441 = vld [vmem:[%s11] sm:$0x1]
    %v1443 = vlaneseq
    %v1444 = vshrl.u32 %v1443, 7
    %v1445 = vsub.s32 0, %v1444
    %v1446 = vrot.slane %v1441, %v1445
    %v1452 = vunpack.c.l.b16 %v1436
    %v1453 = vunpack.c.l.b16 %v1437
    %v1454 = vunpack.c.l.b16 %v1438
    %v1455 = vunpack.c.l.b16 %v1439
    %v1456 = vpack.c.b16 %v1453, %v1452
    %v1457 = vpack.c.b16 %v1455, %v1454
    %v1461 = vsel %vm372, %v1440, 0
    %1463 = vmatprep.subr.bf16.mxu0 0
    %1464 = vmatpush1.bf16.msra.mxu0 %v1456
    %1465 = vmatprep.subr.bf16.mxu0 0
    %1466 = vmatpush1.bf16.msra.mxu0 %v1457
    %1467 = vmatprep.subr.bf16.mxu0 0
    %1468 = vmatpush1.bf16.msra.mxu0 0
    %1469 = vmatprep.subr.bf16.mxu0 0
    %1470 = vmatpush1.bf16.msra.mxu0 0
    %1471 = vmatprep.subr.bf16.mxu0 0
    %1472 = vmatpush1.bf16.msra.mxu0 0
    %1473 = vmatprep.subr.bf16.mxu0 0
    %1474 = vmatpush1.bf16.msra.mxu0 0
    %1475 = vmatprep.subr.bf16.mxu0 0
    %1476 = vmatpush1.bf16.msra.mxu0 0
    %1477 = vmatprep.subr.bf16.mxu0 0
    %1478 = vmatpush1.bf16.msra.mxu0 0
    %1479 = vmatprep.subr.bf16.mxu0 0
    %1480 = vmatpush1.bf16.msra.mxu0 0
    %1481 = vmatprep.subr.bf16.mxu0 0
    %1482 = vmatpush1.bf16.msra.mxu0 0
    %1483 = vmatprep.subr.bf16.mxu0 0
    %1484 = vmatpush1.bf16.msra.mxu0 0
    %1485 = vmatprep.subr.bf16.mxu0 0
    %1486 = vmatpush1.bf16.msra.mxu0 0
    %1487 = vmatprep.subr.bf16.mxu0 0
    %1488 = vmatpush1.bf16.msra.mxu0 0
    %1489 = vmatprep.subr.bf16.mxu0 0
    %1490 = vmatpush1.bf16.msra.mxu0 0
    %1491 = vmatprep.subr.bf16.mxu0 0
    %1492 = vmatpush1.bf16.msra.mxu0 0
    %1493 = vmatprep.subr.bf16.mxu0 0
    %1494 = vmatpush1.bf16.msra.mxu0 0
    %1495 = vmatprep.mubr.bf16.mxu0 0
    %1496 = vmatmul.mubr.bf16.gmra.mrb[0].mxu0 %v1461
    %v1497 = vpop.f32.mrb[0].mxu0
    %v1498 = vadd.f32 %v1446, %v1497
    %v1499 = vpop.f32.mrb[0].mxu0
    %v1500 = vpop.f32.mrb[0].mxu0
    %v1501 = vpop.f32.mrb[0].mxu0
    %1502 = vdwg.mxu0
    %s1503 = scalar_lea.vmem [#allocation16], 16
    %v1504 = vld [vmem:[%s1503] sm:$0xf]
    %v1505 = vld [vmem:[%s1503 + $0x4] sm:$0xf]
    %v1506 = vld [vmem:[%s1503 + $0x8] sm:$0xf]
    %v1507 = vld [vmem:[%s1503 + $0xc] sm:$0xf]
    %s1508 = scalar_lea.vmem %s11, 1
    %v1509 = vld [vmem:[%s1508] sm:$0x1]
    %v1511 = vlaneseq
    %v1512 = vshrl.u32 %v1511, 7
    %v1513 = vsub.s32 0, %v1512
    %v1514 = vrot.slane %v1509, %v1513
    %v1520 = vunpack.c.l.b16 %v1504
    %v1521 = vunpack.c.l.b16 %v1505
    %v1522 = vunpack.c.l.b16 %v1506
    %v1523 = vunpack.c.l.b16 %v1507
    %v1524 = vpack.c.b16 %v1521, %v1520
    %v1525 = vpack.c.b16 %v1523, %v1522
    %1528 = vmatprep.subr.bf16.mxu0 0
    %1529 = vmatpush1.bf16.msra.mxu0 %v1524
    %1530 = vmatprep.subr.bf16.mxu0 0
    %1531 = vmatpush1.bf16.msra.mxu0 %v1525
    %1532 = vmatprep.subr.bf16.mxu0 0
    %1533 = vmatpush1.bf16.msra.mxu0 0
    %1534 = vmatprep.subr.bf16.mxu0 0
    %1535 = vmatpush1.bf16.msra.mxu0 0
    %1536 = vmatprep.subr.bf16.mxu0 0
    %1537 = vmatpush1.bf16.msra.mxu0 0
    %1538 = vmatprep.subr.bf16.mxu0 0
    %1539 = vmatpush1.bf16.msra.mxu0 0
    %1540 = vmatprep.subr.bf16.mxu0 0
    %1541 = vmatpush1.bf16.msra.mxu0 0
    %1542 = vmatprep.subr.bf16.mxu0 0
    %1543 = vmatpush1.bf16.msra.mxu0 0
    %1544 = vmatprep.subr.bf16.mxu0 0
    %1545 = vmatpush1.bf16.msra.mxu0 0
    %1546 = vmatprep.subr.bf16.mxu0 0
    %1547 = vmatpush1.bf16.msra.mxu0 0
    %1548 = vmatprep.subr.bf16.mxu0 0
    %1549 = vmatpush1.bf16.msra.mxu0 0
    %1550 = vmatprep.subr.bf16.mxu0 0
    %1551 = vmatpush1.bf16.msra.mxu0 0
    %1552 = vmatprep.subr.bf16.mxu0 0
    %1553 = vmatpush1.bf16.msra.mxu0 0
    %1554 = vmatprep.subr.bf16.mxu0 0
    %1555 = vmatpush1.bf16.msra.mxu0 0
    %1556 = vmatprep.subr.bf16.mxu0 0
    %1557 = vmatpush1.bf16.msra.mxu0 0
    %1558 = vmatprep.subr.bf16.mxu0 0
    %1559 = vmatpush1.bf16.msra.mxu0 0
    %1560 = vmatprep.mubr.bf16.mxu0 0
    %1561 = vmatmul.mubr.bf16.gmra.mrb[0].mxu0 %v1461
    %v1562 = vpop.f32.mrb[0].mxu0
    %v1563 = vadd.f32 %v1514, %v1562
    %v1564 = vpop.f32.mrb[0].mxu0
    %v1565 = vpop.f32.mrb[0].mxu0
    %v1566 = vpop.f32.mrb[0].mxu0
    %1567 = vdwg.mxu0
    %s1568 = scalar_lea.vmem [#allocation16], 32
    %v1569 = vld [vmem:[%s1568] sm:$0xf]
    %v1570 = vld [vmem:[%s1568 + $0x4] sm:$0xf]
    %v1571 = vld [vmem:[%s1568 + $0x8] sm:$0xf]
    %v1572 = vld [vmem:[%s1568 + $0xc] sm:$0xf]
    %s1573 = scalar_lea.vmem %s11, 2
    %v1574 = vld [vmem:[%s1573] sm:$0x1]
    %v1576 = vlaneseq
    %v1577 = vshrl.u32 %v1576, 7
    %v1578 = vsub.s32 0, %v1577
    %v1579 = vrot.slane %v1574, %v1578
    %v1585 = vunpack.c.l.b16 %v1569
    %v1586 = vunpack.c.l.b16 %v1570
    %v1587 = vunpack.c.l.b16 %v1571
    %v1588 = vunpack.c.l.b16 %v1572
    %v1589 = vpack.c.b16 %v1586, %v1585
    %v1590 = vpack.c.b16 %v1588, %v1587
    %1593 = vmatprep.subr.bf16.mxu0 0
    %1594 = vmatpush1.bf16.msra.mxu0 %v1589
    %1595 = vmatprep.subr.bf16.mxu0 0
    %1596 = vmatpush1.bf16.msra.mxu0 %v1590
    %1597 = vmatprep.subr.bf16.mxu0 0
    %1598 = vmatpush1.bf16.msra.mxu0 0
    %1599 = vmatprep.subr.bf16.mxu0 0
    %1600 = vmatpush1.bf16.msra.mxu0 0
    %1601 = vmatprep.subr.bf16.mxu0 0
    %1602 = vmatpush1.bf16.msra.mxu0 0
    %1603 = vmatprep.subr.bf16.mxu0 0
    %1604 = vmatpush1.bf16.msra.mxu0 0
    %1605 = vmatprep.subr.bf16.mxu0 0
    %1606 = vmatpush1.bf16.msra.mxu0 0
    %1607 = vmatprep.subr.bf16.mxu0 0
    %1608 = vmatpush1.bf16.msra.mxu0 0
    %1609 = vmatprep.subr.bf16.mxu0 0
    %1610 = vmatpush1.bf16.msra.mxu0 0
    %1611 = vmatprep.subr.bf16.mxu0 0
    %1612 = vmatpush1.bf16.msra.mxu0 0
    %1613 = vmatprep.subr.bf16.mxu0 0
    %1614 = vmatpush1.bf16.msra.mxu0 0
    %1615 = vmatprep.subr.bf16.mxu0 0
    %1616 = vmatpush1.bf16.msra.mxu0 0
    %1617 = vmatprep.subr.bf16.mxu0 0
    %1618 = vmatpush1.bf16.msra.mxu0 0
    %1619 = vmatprep.subr.bf16.mxu0 0
    %1620 = vmatpush1.bf16.msra.mxu0 0
    %1621 = vmatprep.subr.bf16.mxu0 0
    %1622 = vmatpush1.bf16.msra.mxu0 0
    %1623 = vmatprep.subr.bf16.mxu0 0
    %1624 = vmatpush1.bf16.msra.mxu0 0
    %1625 = vmatprep.mubr.bf16.mxu0 0
    %1626 = vmatmul.mubr.bf16.gmra.mrb[0].mxu0 %v1461
    %v1627 = vpop.f32.mrb[0].mxu0
    %v1628 = vadd.f32 %v1579, %v1627
    %v1629 = vpop.f32.mrb[0].mxu0
    %v1630 = vpop.f32.mrb[0].mxu0
    %v1631 = vpop.f32.mrb[0].mxu0
    %1632 = vdwg.mxu0
    %v1633 = vadd.f32 %v1205, %v1498
    %v1634 = vxor.u32 %v1633, 2147483648
    %v1635 = vmul.f32 %v1634, 1.442695
    %v1636 = vpow.pop %v1635
    %v1637 = vadd.f32 %v1636, 1.0
    %v1638 = vrcp.pop %v1637
    %v1639 = vmul.f32 1.0, %v1638
    %v1640 = vadd.f32 %v1320, %v1563
    %v1641 = vxor.u32 %v1640, 2147483648
    %v1642 = vmul.f32 %v1641, 1.442695
    %v1643 = vpow.pop %v1642
    %v1644 = vadd.f32 %v1643, 1.0
    %v1645 = vrcp.pop %v1644
    %v1646 = vmul.f32 1.0, %v1645
    %v1647 = vmul.f32 %v1639, %v1628
    %v1648 = vadd.f32 %v1435, %v1647
    %v1649 = vtanh.pop %v1648
    %v1650 = vsub.f32 1.0, %v1646
    %v1651 = vmul.f32 %v1650, %v1649
    %v1652 = vmul.f32 %v1646, %v566
    %v1653 = vadd.f32 %v1651, %v1652
    %1654 = vst.msk [vmem:[#allocation17] sm:$0xff] %vm372, %v1653
    %v1663 = vsel %vm739, %v1016, %v1009
    %v1664 = vsel %vm741, %v1023, %v1663
    %v1665 = vsel %vm743, %v1030, %v1664
    %v1666 = vsel %vm745, %v1037, %v1665
    %v1667 = vsel %vm747, %v1044, %v1666
    %v1668 = vsel %vm749, %v1051, %v1667
    %v1669 = vsel %vm751, %v1058, %v1668
    %1671 = vst.msk [vmem:[#allocation18] sm:$0xff] %vm372, %v1669
    // Predicated region
    $region86: #{tpu_custom_call.1} parent=1 // pred_check
      _
    $region87: #{tpu_custom_call.1} parent=1 // pred_check_branch
      %1673 = sbr.rel (0) target = $region89
    $region88: #{tpu_custom_call.1} parent=1 // pred_region
      %s1675 = ssub.s32 128, 128
      %1676 = vsyncadd [#allocation4], %s1675
      %s1678 = sshll.u32 [#allocation17], 4
      %s1679 = int_to_ptr.vmem [resolvable:$true] %s1678
      %1681 = dma.vmem_to_hbm [thread:$0]  %s1679, 128, %s12, [#allocation4]
    $region89: #{tpu_custom_call.1} parent=1 // pred_fallthru
      _
    // Predicated region
    $region90: #{tpu_custom_call.1} parent=1 // pred_check
      _
    $region91: #{tpu_custom_call.1} parent=1 // pred_check_branch
      %1683 = sbr.rel (0) target = $region93
    $region92: #{tpu_custom_call.1} parent=1 // pred_region
      %s1685 = ssub.s32 128, 128
      %1686 = vsyncadd [#allocation19], %s1685
      %s1688 = sshll.u32 [#allocation18], 4
      %s1689 = int_to_ptr.vmem [resolvable:$true] %s1688
      %1691 = dma.vmem_to_hbm [thread:$0]  %s1689, 128, %s13, [#allocation19]
    $region93: #{tpu_custom_call.1} parent=1 // pred_fallthru
      _
    // Predicated region
    $region94: #{tpu_custom_call.1} parent=1 // pred_check
      _
    $region95: #{tpu_custom_call.1} parent=1 // pred_check_branch
      %1693 = sbr.rel (0) target = $region97
    $region96: #{tpu_custom_call.1} parent=1 // pred_region
      %1694 = dma.done [#allocation4], 128
    $region97: #{tpu_custom_call.1} parent=1 // pred_fallthru
      _
    // Predicated region
    $region98: #{tpu_custom_call.1} parent=1 // pred_check
      _
    $region99: #{tpu_custom_call.1} parent=1 // pred_check_branch
      %1696 = sbr.rel (0) target = $region101
    $region100: #{tpu_custom_call.1} parent=1 // pred_region
      %1697 = dma.done [#allocation19], 128
    $region101: #{tpu_custom_call.1} parent=1 // pred_fallthru
      _
    %1698 = vsyncpa [#allocation3], 1
    %1699 = vsyncpa [#allocation6], 1
    %1700 = vsyncpa [#allocation9], 1
    %1701 = vsyncpa [#allocation12], 1
    %1702 = vsyncpa [#allocation15], 1
    %1703 = vsyncpa [#allocation4], 1
    %1704 = vsyncpa [#allocation19], 1

</llo_original>
